<compile_context>
chip_gen: v7x
topology: tpu7x:2x2x1
jax: 0.10.0
libtpu: 0.0.40
codegen_flags: <defaults>
</compile_context>

<pallas_src>
import functools

import jax
import jax.numpy as jnp
from jax.experimental import pallas as pl
from jax.experimental.pallas import tpu as pltpu


def _round_up(x, m):
    return ((x + m - 1) // m) * m


def _cross_attn_kernel(x_ref, cond_ref, wq_ref, wk_ref, wv_ref, wo3_ref, bo_ref,
                       o_ref, *, n_heads, d_head, compute_dtype):
    """One grid step: one (batch, query-block) tile.

    Fused QKV projection, head-batched scaled-dot-product attention with a
    numerically stable softmax, and the head-batched output projection.
    """
    x = x_ref[0]       # (TS, Dm_p)  compute_dtype
    c = cond_ref[0]    # (T,  Dc_p)  compute_dtype

    # Full-width projections on the MXU with f32 accumulation.  The softmax
    # scale is already folded into W_q by the wrapper.
    q2 = jnp.dot(x, wq_ref[...], preferred_element_type=jnp.float32)   # (TS, d_attn)
    k2 = jnp.dot(c, wk_ref[...], preferred_element_type=jnp.float32)   # (T,  d_attn)
    v2 = jnp.dot(c, wv_ref[...], preferred_element_type=jnp.float32)   # (T,  d_attn)

    q2 = q2.astype(compute_dtype)
    k2 = k2.astype(compute_dtype)
    v2 = v2.astype(compute_dtype)

    # Gather heads into a leading batch dim (H, seq, d_head): one static slab
    # per head per tile; every matmul below is then head-batched on the MXU.
    def split_heads(t):
        return jnp.stack(
            [t[:, h * d_head:(h + 1) * d_head] for h in range(n_heads)], axis=0)

    qh = split_heads(q2)   # (H, TS, dh)
    kh = split_heads(k2)   # (H, T,  dh)
    vh = split_heads(v2)   # (H, T,  dh)

    # Head-batched attention scores (contraction over d_head, no transposes).
    s = jnp.einsum('hqd,hkd->hqk', qh, kh,
                   preferred_element_type=jnp.float32)                  # (H, TS, T) f32

    # Numerically stable softmax; stats in f32; divide via EUP reciprocal.
    m = jnp.max(s, axis=-1, keepdims=True)
    p = jnp.exp(s - m)
    denom = jnp.sum(p, axis=-1, keepdims=True)
    p = p * pl.reciprocal(denom, approx=True)

    # Head-batched P @ V  -> (H, TS, dh)
    o = jnp.einsum('hqk,hkd->hqd', p.astype(compute_dtype), vh,
                   preferred_element_type=jnp.float32)

    # Head-batched output projection with per-head W_o slabs (H, dh, Dm_p),
    # reduced over heads.  Equivalent to concat(heads) @ W_o, without the
    # minor-dim concat.
    y = jnp.einsum('hqd,hdm->hqm', o.astype(compute_dtype), wo3_ref[...],
                   preferred_element_type=jnp.float32)                  # (H, TS, Dm_p)
    y = jnp.sum(y, axis=0) + bo_ref[...].astype(jnp.float32)            # (TS, Dm_p)

    o_ref[0] = y.astype(o_ref.dtype)


def cross_attention(x, cond, params, *, n_heads, d_head,
                    compute_dtype=jnp.bfloat16, block_q=512):
    """x: (B, S, d_model); cond: (B, T, d_cond) or None (self-attention fallback)."""
    if cond is None:
        cond = x  # self-attention fallback; requires params built with d_cond == d_model

    B, S, d_model = x.shape
    Bc, T, d_cond = cond.shape
    assert Bc == B
    d_attn = n_heads * d_head
    scale = float(d_head) ** -0.5

    wq, wk, wv, wo, bo = (params["wq"], params["wk"], params["wv"],
                          params["wo"], params["bo"])
    assert wq.shape == (d_model, d_attn)
    assert wk.shape == (d_cond, d_attn), "self-attention fallback requires d_cond == d_model params"
    assert wv.shape == (d_cond, d_attn)
    assert wo.shape == (d_attn, d_model)
    assert bo.shape == (1, d_model)

    f32 = jnp.float32

    # Lane-dense zero padding of feature dims to multiples of 128 (identical math,
    # unmasked vector stores); query length padded to a multiple of the S tile.
    dm_p = _round_up(d_model, 128)
    dc_p = _round_up(d_cond, 128)
    ts = min(block_q, _round_up(S, 8))
    s_p = _round_up(S, ts)

    x_p = jnp.zeros((B, s_p, dm_p), compute_dtype).at[:, :S, :d_model].set(
        x.astype(compute_dtype))
    c_p = jnp.zeros((B, T, dc_p), compute_dtype).at[:, :, :d_cond].set(
        cond.astype(compute_dtype))

    # Fold the softmax scale into W_q; zero-pad the contracted dims.
    wq_p = jnp.zeros((dm_p, d_attn), compute_dtype).at[:d_model, :].set(
        (wq.astype(f32) * scale).astype(compute_dtype))
    wk_p = jnp.zeros((dc_p, d_attn), compute_dtype).at[:d_cond, :].set(
        wk.astype(compute_dtype))
    wv_p = jnp.zeros((dc_p, d_attn), compute_dtype).at[:d_cond, :].set(
        wv.astype(compute_dtype))
    # Per-head output-projection slabs: (H, d_head, Dm_p).
    wo3 = jnp.zeros((n_heads, d_head, dm_p), compute_dtype).at[:, :, :d_model].set(
        wo.reshape(n_heads, d_head, d_model).astype(compute_dtype))
    bo_p = jnp.zeros((1, dm_p), f32).at[:, :d_model].set(bo.astype(f32))

    kernel = functools.partial(_cross_attn_kernel, n_heads=n_heads, d_head=d_head,
                               compute_dtype=compute_dtype)

    # NOTE: weight blocks have constant index maps so they are fetched once; the
    # default double-buffering of these small blocks is an acceptable VMEM cost.
    grid_spec = pltpu.PrefetchScalarGridSpec(
        num_scalar_prefetch=0,
        grid=(B, s_p // ts),
        in_specs=[
            pl.BlockSpec((1, ts, dm_p), lambda b, s: (b, s, 0)),            # x tile
            pl.BlockSpec((1, T, dc_p), lambda b, s: (b, 0, 0)),             # cond (full T)
            pl.BlockSpec((dm_p, d_attn), lambda b, s: (0, 0)),              # wq (scale folded)
            pl.BlockSpec((dc_p, d_attn), lambda b, s: (0, 0)),              # wk
            pl.BlockSpec((dc_p, d_attn), lambda b, s: (0, 0)),              # wv
            pl.BlockSpec((n_heads, d_head, dm_p), lambda b, s: (0, 0, 0)),  # wo per-head
            pl.BlockSpec((1, dm_p), lambda b, s: (0, 0)),                   # bias
        ],
        out_specs=pl.BlockSpec((1, ts, dm_p), lambda b, s: (b, s, 0)),
    )

    out_p = pl.pallas_call(
        kernel,
        out_shape=jax.ShapeDtypeStruct((B, s_p, dm_p), x.dtype),
        grid_spec=grid_spec,
        compiler_params=pltpu.CompilerParams(
            dimension_semantics=("parallel", "parallel"),
            vmem_limit_bytes=48 * 1024 * 1024,
        ),
    )(x_p, c_p, wq_p, wk_p, wv_p, wo3, bo_p)

    return out_p[:, :S, :d_model]


def _reference(x, cond, params, *, n_heads, d_head):
    """Pure-JAX reference mirroring the PyTorch normal_attention path."""
    if cond is None:
        cond = x
    scale = float(d_head) ** -0.5
    q = x @ params["wq"]
    k = cond @ params["wk"]
    v = cond @ params["wv"]
    B, S, _ = q.shape
    T = k.shape[1]
    q = q.reshape(B, S, n_heads, d_head)
    k = k.reshape(B, T, n_heads, d_head)
    v = v.reshape(B, T, n_heads, d_head)
    attn = jnp.einsum("bihd,bjhd->bhij", q, k) * scale
    attn = jax.nn.softmax(attn, axis=-1)
    out = jnp.einsum("bhij,bjhd->bihd", attn, v).reshape(B, S, n_heads * d_head)
    return out @ params["wo"] + params["bo"][0]


def make_params(key, d_model, d_cond, n_heads, d_head, dtype=jnp.float32):
    d_attn = n_heads * d_head
    k1, k2, k3, k4, k5 = jax.random.split(key, 5)
    init = lambda k, shape: (0.02 * jax.random.normal(k, shape)).astype(dtype)
    return {
        "wq": init(k1, (d_model, d_attn)),
        "wk": init(k2, (d_cond, d_attn)),
        "wv": init(k3, (d_cond, d_attn)),
        "wo": init(k4, (d_attn, d_model)),
        "bo": init(k5, (1, d_model)),
    }


if __name__ == "__main__":
    # Small, forward-consistent shapes:
    #   batch=2, seq = height*width = 16, d_model=32, n_cond=8, d_cond=16,
    #   n_heads=4, d_head=8  (d_attn = 32)
    B, S, D_MODEL = 2, 16, 32
    T, D_COND = 8, 16
    N_HEADS, D_HEAD = 4, 8

    key = jax.random.PRNGKey(0)
    kx, kc, kp = jax.random.split(key, 3)
    x = jax.random.normal(kx, (B, S, D_MODEL), dtype=jnp.float32)
    cond = jax.random.normal(kc, (B, T, D_COND), dtype=jnp.float32)
    params = make_params(kp, D_MODEL, D_COND, N_HEADS, D_HEAD)

    ref = _reference(x, cond, params, n_heads=N_HEADS, d_head=D_HEAD)

    # f32 compute path: tight correctness check.
    out_f32 = cross_attention(x, cond, params, n_heads=N_HEADS, d_head=D_HEAD,
                              compute_dtype=jnp.float32)
    out_f32 = jax.block_until_ready(out_f32)
    assert out_f32.shape == (B, S, D_MODEL)
    assert jnp.allclose(out_f32, ref, atol=1e-4, rtol=1e-4), "f32 mismatch vs reference"

    # bf16 MXU path (default / performance path): looser tolerance.
    out_bf16 = cross_attention(x, cond, params, n_heads=N_HEADS, d_head=D_HEAD,
                               compute_dtype=jnp.bfloat16)
    out_bf16 = jax.block_until_ready(out_bf16)
    assert out_bf16.shape == (B, S, D_MODEL)
    assert jnp.allclose(out_bf16, ref, atol=1e-2, rtol=1e-2), "bf16 mismatch vs reference"

    print("KERNEL_OK")
</pallas_src>

<mosaic_0001>
module attributes {stable_mosaic.version = 11 : i64} {
  func.func @_cross_attn_kernel(%arg0: i32, %arg1: i32, %arg2: memref<1x16x128xf32, #tpu.memory_space<vmem>>, %arg3: memref<1x8x128xf32, #tpu.memory_space<vmem>>, %arg4: memref<128x32xf32, #tpu.memory_space<vmem>>, %arg5: memref<128x32xf32, #tpu.memory_space<vmem>>, %arg6: memref<128x32xf32, #tpu.memory_space<vmem>>, %arg7: memref<4x8x128xf32, #tpu.memory_space<vmem>>, %arg8: memref<1x128xf32, #tpu.memory_space<vmem>>, %arg9: memref<1x16x128xf32, #tpu.memory_space<vmem>>) attributes {dimension_semantics = [#tpu.dimension_semantics<parallel>, #tpu.dimension_semantics<parallel>], iteration_bounds = array<i64: 2, 1>, scalar_prefetch = 0 : i64, scratch_operands = 0 : i64, tpu.core_type = #tpu.core_type<tc>, window_params = [{transform_indices = @transform_0, window_bounds = array<i64: 1, 16, 128>}, {transform_indices = @transform_1, window_bounds = array<i64: 1, 8, 128>}, {pipeline_mode = #tpu.pipeline_mode<synchronous>, transform_indices = @transform_2, window_bounds = array<i64: 128, 32>}, {pipeline_mode = #tpu.pipeline_mode<synchronous>, transform_indices = @transform_3, window_bounds = array<i64: 128, 32>}, {pipeline_mode = #tpu.pipeline_mode<synchronous>, transform_indices = @transform_4, window_bounds = array<i64: 128, 32>}, {pipeline_mode = #tpu.pipeline_mode<synchronous>, transform_indices = @transform_5, window_bounds = array<i64: 4, 8, 128>}, {pipeline_mode = #tpu.pipeline_mode<synchronous>, transform_indices = @transform_6, window_bounds = array<i64: 1, 128>}, {transform_indices = @transform_7, window_bounds = array<i64: 1, 16, 128>}]} {
    %c0 = arith.constant 0 : index
    %c0_0 = arith.constant 0 : index
    %c0_1 = arith.constant 0 : index
    %0 = vector.load %arg2[%c0, %c0_0, %c0_1] : memref<1x16x128xf32, #tpu.memory_space<vmem>>, vector<1x16x128xf32>
    %1 = vector.shape_cast %0 : vector<1x16x128xf32> to vector<16x128xf32>
    %c0_2 = arith.constant 0 : index
    %c0_3 = arith.constant 0 : index
    %c0_4 = arith.constant 0 : index
    %2 = vector.load %arg3[%c0_2, %c0_3, %c0_4] : memref<1x8x128xf32, #tpu.memory_space<vmem>>, vector<1x8x128xf32>
    %3 = vector.shape_cast %2 : vector<1x8x128xf32> to vector<8x128xf32>
    %c0_5 = arith.constant 0 : index
    %c0_6 = arith.constant 0 : index
    %4 = vector.load %arg4[%c0_5, %c0_6] : memref<128x32xf32, #tpu.memory_space<vmem>>, vector<128x32xf32>
    %cst = arith.constant dense<0.000000e+00> : vector<16x32xf32>
    %5 = tpu.matmul %1, %4, %cst {dimension_numbers = #tpu.dot_dimension_numbers<[1], [0], [0], [1], [0, 0, 1, 1], [], []>} : vector<16x128xf32>, vector<128x32xf32>, vector<16x32xf32> -> vector<16x32xf32>
    %c0_7 = arith.constant 0 : index
    %c0_8 = arith.constant 0 : index
    %6 = vector.load %arg5[%c0_7, %c0_8] : memref<128x32xf32, #tpu.memory_space<vmem>>, vector<128x32xf32>
    %cst_9 = arith.constant dense<0.000000e+00> : vector<8x32xf32>
    %7 = tpu.matmul %3, %6, %cst_9 {dimension_numbers = #tpu.dot_dimension_numbers<[1], [0], [0], [1], [0, 0, 1, 1], [], []>} : vector<8x128xf32>, vector<128x32xf32>, vector<8x32xf32> -> vector<8x32xf32>
    %c0_10 = arith.constant 0 : index
    %c0_11 = arith.constant 0 : index
    %8 = vector.load %arg6[%c0_10, %c0_11] : memref<128x32xf32, #tpu.memory_space<vmem>>, vector<128x32xf32>
    %cst_12 = arith.constant dense<0.000000e+00> : vector<8x32xf32>
    %9 = tpu.matmul %3, %8, %cst_12 {dimension_numbers = #tpu.dot_dimension_numbers<[1], [0], [0], [1], [0, 0, 1, 1], [], []>} : vector<8x128xf32>, vector<128x32xf32>, vector<8x32xf32> -> vector<8x32xf32>
    %10 = vector.extract_strided_slice %5 {offsets = [0, 0], sizes = [16, 8], strides = [1, 1]} : vector<16x32xf32> to vector<16x8xf32>
    %11 = vector.extract_strided_slice %5 {offsets = [0, 8], sizes = [16, 8], strides = [1, 1]} : vector<16x32xf32> to vector<16x8xf32>
    %12 = vector.extract_strided_slice %5 {offsets = [0, 16], sizes = [16, 8], strides = [1, 1]} : vector<16x32xf32> to vector<16x8xf32>
    %13 = vector.extract_strided_slice %5 {offsets = [0, 24], sizes = [16, 8], strides = [1, 1]} : vector<16x32xf32> to vector<16x8xf32>
    %14 = vector.shape_cast %10 : vector<16x8xf32> to vector<1x16x8xf32>
    %15 = vector.shape_cast %11 : vector<16x8xf32> to vector<1x16x8xf32>
    %16 = vector.shape_cast %12 : vector<16x8xf32> to vector<1x16x8xf32>
    %17 = vector.shape_cast %13 : vector<16x8xf32> to vector<1x16x8xf32>
    %18 = tpu.concatenate %14, %15, %16, %17 in 0 : vector<1x16x8xf32>, vector<1x16x8xf32>, vector<1x16x8xf32>, vector<1x16x8xf32> -> vector<4x16x8xf32>
    %19 = vector.extract_strided_slice %7 {offsets = [0, 0], sizes = [8, 8], strides = [1, 1]} : vector<8x32xf32> to vector<8x8xf32>
    %20 = vector.extract_strided_slice %7 {offsets = [0, 8], sizes = [8, 8], strides = [1, 1]} : vector<8x32xf32> to vector<8x8xf32>
    %21 = vector.extract_strided_slice %7 {offsets = [0, 16], sizes = [8, 8], strides = [1, 1]} : vector<8x32xf32> to vector<8x8xf32>
    %22 = vector.extract_strided_slice %7 {offsets = [0, 24], sizes = [8, 8], strides = [1, 1]} : vector<8x32xf32> to vector<8x8xf32>
    %23 = vector.shape_cast %19 : vector<8x8xf32> to vector<1x8x8xf32>
    %24 = vector.shape_cast %20 : vector<8x8xf32> to vector<1x8x8xf32>
    %25 = vector.shape_cast %21 : vector<8x8xf32> to vector<1x8x8xf32>
    %26 = vector.shape_cast %22 : vector<8x8xf32> to vector<1x8x8xf32>
    %27 = tpu.concatenate %23, %24, %25, %26 in 0 : vector<1x8x8xf32>, vector<1x8x8xf32>, vector<1x8x8xf32>, vector<1x8x8xf32> -> vector<4x8x8xf32>
    %28 = vector.extract_strided_slice %9 {offsets = [0, 0], sizes = [8, 8], strides = [1, 1]} : vector<8x32xf32> to vector<8x8xf32>
    %29 = vector.extract_strided_slice %9 {offsets = [0, 8], sizes = [8, 8], strides = [1, 1]} : vector<8x32xf32> to vector<8x8xf32>
    %30 = vector.extract_strided_slice %9 {offsets = [0, 16], sizes = [8, 8], strides = [1, 1]} : vector<8x32xf32> to vector<8x8xf32>
    %31 = vector.extract_strided_slice %9 {offsets = [0, 24], sizes = [8, 8], strides = [1, 1]} : vector<8x32xf32> to vector<8x8xf32>
    %32 = vector.shape_cast %28 : vector<8x8xf32> to vector<1x8x8xf32>
    %33 = vector.shape_cast %29 : vector<8x8xf32> to vector<1x8x8xf32>
    %34 = vector.shape_cast %30 : vector<8x8xf32> to vector<1x8x8xf32>
    %35 = vector.shape_cast %31 : vector<8x8xf32> to vector<1x8x8xf32>
    %36 = tpu.concatenate %32, %33, %34, %35 in 0 : vector<1x8x8xf32>, vector<1x8x8xf32>, vector<1x8x8xf32>, vector<1x8x8xf32> -> vector<4x8x8xf32>
    "tpu.trace_start"() <{level = 10 : i32, message = "hqd,hkd->hqk"}> : () -> ()
    %cst_13 = arith.constant dense<0.000000e+00> : vector<4x16x8xf32>
    %37 = tpu.matmul %18, %27, %cst_13 {dimension_numbers = #tpu.dot_dimension_numbers<[2], [2], [1], [1], [0, 0, 0, 1, 1, 1], [0], [0]>} : vector<4x16x8xf32>, vector<4x8x8xf32>, vector<4x16x8xf32> -> vector<4x16x8xf32>
    "tpu.trace_stop"() : () -> ()
    %cst_14 = arith.constant dense<0xFF800000> : vector<4x16xf32>
    %38 = vector.multi_reduction <maximumf>, %37, %cst_14 [2] : vector<4x16x8xf32> to vector<4x16xf32>
    %39 = vector.shape_cast %38 : vector<4x16xf32> to vector<4x16x1xf32>
    %40 = vector.broadcast %39 : vector<4x16x1xf32> to vector<4x16x8xf32>
    %41 = arith.subf %37, %40 : vector<4x16x8xf32>
    %42 = math.exp %41 : vector<4x16x8xf32>
    %cst_15 = arith.constant dense<0.000000e+00> : vector<4x16xf32>
    %43 = vector.multi_reduction <add>, %42, %cst_15 [2] : vector<4x16x8xf32> to vector<4x16xf32>
    %44 = vector.shape_cast %43 : vector<4x16xf32> to vector<4x16x1xf32>
    %45 = tpu.reciprocal %44 {approx = true} : vector<4x16x1xf32> -> vector<4x16x1xf32>
    %46 = vector.broadcast %45 : vector<4x16x1xf32> to vector<4x16x8xf32>
    %47 = arith.mulf %42, %46 : vector<4x16x8xf32>
    "tpu.trace_start"() <{level = 10 : i32, message = "hqk,hkd->hqd"}> : () -> ()
    %cst_16 = arith.constant dense<0.000000e+00> : vector<4x16x8xf32>
    %48 = tpu.matmul %47, %36, %cst_16 {dimension_numbers = #tpu.dot_dimension_numbers<[2], [1], [1], [2], [0, 0, 0, 1, 1, 2], [0], [0]>} : vector<4x16x8xf32>, vector<4x8x8xf32>, vector<4x16x8xf32> -> vector<4x16x8xf32>
    "tpu.trace_stop"() : () -> ()
    %c0_17 = arith.constant 0 : index
    %c0_18 = arith.constant 0 : index
    %c0_19 = arith.constant 0 : index
    %49 = vector.load %arg7[%c0_17, %c0_18, %c0_19] : memref<4x8x128xf32, #tpu.memory_space<vmem>>, vector<4x8x128xf32>
    "tpu.trace_start"() <{level = 10 : i32, message = "hqd,hdm->hqm"}> : () -> ()
    %cst_20 = arith.constant dense<0.000000e+00> : vector<4x16x128xf32>
    %50 = tpu.matmul %48, %49, %cst_20 {dimension_numbers = #tpu.dot_dimension_numbers<[2], [1], [1], [2], [0, 0, 0, 1, 1, 2], [0], [0]>} : vector<4x16x8xf32>, vector<4x8x128xf32>, vector<4x16x128xf32> -> vector<4x16x128xf32>
    "tpu.trace_stop"() : () -> ()
    %cst_21 = arith.constant dense<0.000000e+00> : vector<16x128xf32>
    %51 = vector.multi_reduction <add>, %50, %cst_21 [0] : vector<4x16x128xf32> to vector<16x128xf32>
    %c0_22 = arith.constant 0 : index
    %c0_23 = arith.constant 0 : index
    %52 = vector.load %arg8[%c0_22, %c0_23] : memref<1x128xf32, #tpu.memory_space<vmem>>, vector<1x128xf32>
    %53 = vector.broadcast %52 : vector<1x128xf32> to vector<16x128xf32>
    %54 = arith.addf %51, %53 : vector<16x128xf32>
    %c0_24 = arith.constant 0 : index
    %c0_25 = arith.constant 0 : index
    %c0_26 = arith.constant 0 : index
    %55 = vector.load %arg9[%c0_24, %c0_25, %c0_26] : memref<1x16x128xf32, #tpu.memory_space<vmem>>, vector<1x16x128xf32>
    %56 = vector.shape_cast %55 : vector<1x16x128xf32> to vector<16x128xf32>
    %57 = vector.shape_cast %54 : vector<16x128xf32> to vector<1x16x128xf32>
    tpu.vector_store %arg9[%c0_24, %c0_25, %c0_26], %57 {strides = array<i32>} : memref<1x16x128xf32, #tpu.memory_space<vmem>>, vector<1x16x128xf32>,
    return
  }
  func.func @transform_0(%arg0: i32, %arg1: i32) -> (i32, i32, i32) {
    %c0_i32 = arith.constant 0 : i32
    %c0_i32_0 = arith.constant 0 : i32
    return %arg0, %arg1, %c0_i32 : i32, i32, i32
  }
  func.func @transform_1(%arg0: i32, %arg1: i32) -> (i32, i32, i32) {
    %c0_i32 = arith.constant 0 : i32
    %c0_i32_0 = arith.constant 0 : i32
    %c0_i32_1 = arith.constant 0 : i32
    return %arg0, %c0_i32, %c0_i32_0 : i32, i32, i32
  }
  func.func @transform_2(%arg0: i32, %arg1: i32) -> (i32, i32) {
    %c0_i32 = arith.constant 0 : i32
    %c0_i32_0 = arith.constant 0 : i32
    %c0_i32_1 = arith.constant 0 : i32
    return %c0_i32, %c0_i32_0 : i32, i32
  }
  func.func @transform_3(%arg0: i32, %arg1: i32) -> (i32, i32) {
    %c0_i32 = arith.constant 0 : i32
    %c0_i32_0 = arith.constant 0 : i32
    %c0_i32_1 = arith.constant 0 : i32
    return %c0_i32, %c0_i32_0 : i32, i32
  }
  func.func @transform_4(%arg0: i32, %arg1: i32) -> (i32, i32) {
    %c0_i32 = arith.constant 0 : i32
    %c0_i32_0 = arith.constant 0 : i32
    %c0_i32_1 = arith.constant 0 : i32
    return %c0_i32, %c0_i32_0 : i32, i32
  }
  func.func @transform_5(%arg0: i32, %arg1: i32) -> (i32, i32, i32) {
    %c0_i32 = arith.constant 0 : i32
    %c0_i32_0 = arith.constant 0 : i32
    %c0_i32_1 = arith.constant 0 : i32
    %c0_i32_2 = arith.constant 0 : i32
    return %c0_i32, %c0_i32_0, %c0_i32_1 : i32, i32, i32
  }
  func.func @transform_6(%arg0: i32, %arg1: i32) -> (i32, i32) {
    %c0_i32 = arith.constant 0 : i32
    %c0_i32_0 = arith.constant 0 : i32
    %c0_i32_1 = arith.constant 0 : i32
    return %c0_i32, %c0_i32_0 : i32, i32
  }
  func.func @transform_7(%arg0: i32, %arg1: i32) -> (i32, i32, i32) {
    %c0_i32 = arith.constant 0 : i32
    %c0_i32_0 = arith.constant 0 : i32
    return %arg0, %arg1, %c0_i32 : i32, i32, i32
  }
}

</mosaic_0001>

<llo_original>
// kernel: tpu_custom_call.1
$region0: #{tpu_custom_call.1}
  #allocation0 [shape = 'u32[]', space=smem, size = 0x4, offset = 0x4, fixed_abs, tag = 'smem constant byte address 0x4 - core index']
  #allocation1 [shape = 'u32[144,128]{1,0:T(1,128)}', space=vmem, size = 0x12000, scoped, tag = 'internal scratch']
  %s0 = inlined_call_operand.vmem [shape: f32[2,16,128], index: 0, kind: input, shape index: {}]
  %s1 = inlined_call_operand.vmem [shape: f32[2,8,128], index: 1, kind: input, shape index: {}]
  %s2 = inlined_call_operand.vmem [shape: f32[128,32], index: 2, kind: input, shape index: {}]
  %s3 = inlined_call_operand.vmem [shape: f32[128,32], index: 3, kind: input, shape index: {}]
  %s4 = inlined_call_operand.vmem [shape: f32[128,32], index: 4, kind: input, shape index: {}]
  %s5 = inlined_call_operand.vmem [shape: f32[4,8,128], index: 5, kind: input, shape index: {}]
  %s6 = inlined_call_operand.vmem [shape: f32[1,128], index: 6, kind: input, shape index: {}]
  %s7 = inlined_call_operand.hbm [shape: f32[2,16,128], index: 7, kind: output, shape index: {}]
  %s8 = sld [smem:[#allocation0]]
  $region61: #{tpu_custom_call.1} parent=0
    _
  %s10 = ssub.s32 1, %s8
  %s11 = scalar_select 0, %s10, %s8
  $region1: #{tpu_custom_call.1} parent=0
    #allocation2 [shape = 'u8[16384]{0}', space=vmem, size = 0x4000, scoped, tag = 'output window, operand 0']
    #allocation3 [shape = 's32[2]{0}', space=sflag, size = 0x8, scoped, tag = 'scoped memory for tpu_custom_call.1']
    %12 = vsyncpa [#allocation3], 0
    %s13 = scalar_lea.sflag [#allocation3], 1
    %14 = vsyncpa %s13, 0
    loop: start=0, step=1, limit=4
    $region2: #{tpu_custom_call.1} parent=1 // loop_pre_header
      _
    $region3: #{tpu_custom_call.1} parent=1 // loop_header
      %s16 = sphi 0, %s20
      %p17 = scmp.ge.s32.totalorder %s16, 4
      %s23 = sphi 0, %s35
      %s24 = sphi 0, %s31
      %s25 = sphi 0, %s23
      %s26 = sphi 0, %s24
      %s27 = sphi 0, %s25
      %s28 = sphi 0, %s26
      %s40 = sphi 0, %s42
      %s43 = sphi 0, %s40
      %s44 = sphi 0, %s43
      %s60 = sphi 0, %s44
      %s66 = sphi 0, %s68
      %s69 = sphi 0, %s66
      %s70 = sphi 0, %s69
      %s86 = sphi 0, %s70
      %s90 = sphi 0, %s90
      %s92 = sphi 0, %s90
      %s93 = sphi 0, %s92
      %s107 = sphi 0, %s93
      %s111 = sphi 0, %s111
      %s113 = sphi 0, %s111
      %s114 = sphi 0, %s113
      %s128 = sphi 0, %s114
      %s132 = sphi 0, %s132
      %s134 = sphi 0, %s132
      %s135 = sphi 0, %s134
      %s149 = sphi 0, %s135
      %s153 = sphi 0, %s153
      %s155 = sphi 0, %s153
      %s156 = sphi 0, %s155
      %s170 = sphi 0, %s156
      %s174 = sphi 0, %s174
      %s176 = sphi 0, %s174
      %s177 = sphi 0, %s176
      %s191 = sphi 0, %s177
      %s199 = sphi 0, %s201
      %s202 = sphi 0, %s199
      %s203 = sphi 0, %s202
      %s219 = sphi 0, %s203
    $region4: #{tpu_custom_call.1} parent=1 // loop_header_branch
      %19 = sbr.rel (%p17) target = $region8
    $region5: #{tpu_custom_call.1} parent=1 // loop_body
      %s21 = ssub.s32 %s16, 1
      %s22 = ssub.s32 %s16, 2
      %s29 = sadd.s32 1, %s24
      %p30 = scmp.ge.s32.totalorder %s29, 1
      %s31 = scalar_select %p30, 0, %s29
      %s32 = sadd.s32 1, %s23
      %s33 = scalar_select %p30, %s32, %s23
      %p34 = scmp.ge.s32.totalorder %s33, 2
      %s35 = scalar_select %p34, 0, %s33
      %s36 = ssub.s32 %s23, %s35
      %s37 = ssub.s32 %s24, %s31
      %s38 = sor.u32 %s36, %s37
      %p39 = scmp.eq.s32.totalorder %s38, 0
      %s41 = sadd.s32 %s40, 1
      %s42 = scalar_select %p39, %s40, %s41
      %p45 = pneg %p39
      %p46 = scmp.eq.s32.totalorder %s16, 1
      %p47 = por %p45, %p46
      %p48 = scmp.ne.s32.totalorder %s40, %s43
      %p49 = scmp.eq.s32.totalorder %s16, 0
      %p50 = por %p48, %p49
      %p51 = scmp.ne.s32.totalorder %s40, %s43
      %p52 = scmp.eq.s32.totalorder %s21, 1
      %p53 = por %p51, %p52
      %p54 = scmp.ne.s32.totalorder %s43, %s44
      %p55 = scmp.eq.s32.totalorder %s21, 0
      %p56 = por %p54, %p55
      %p57 = scmp.ne.s32.totalorder %s43, %s44
      %p58 = scmp.eq.s32.totalorder %s22, 1
      %p59 = por %p57, %p58
      %p61 = scmp.ne.s32.totalorder %s44, %s60
      %p62 = scmp.eq.s32.totalorder %s22, 0
      %p63 = por %p61, %p62
      %s64 = ssub.s32 %s23, %s35
      %p65 = scmp.eq.s32.totalorder %s64, 0
      %s67 = sadd.s32 %s66, 1
      %s68 = scalar_select %p65, %s66, %s67
      %p71 = pneg %p65
      %p72 = scmp.eq.s32.totalorder %s16, 1
      %p73 = por %p71, %p72
      %p74 = scmp.ne.s32.totalorder %s66, %s69
      %p75 = scmp.eq.s32.totalorder %s16, 0
      %p76 = por %p74, %p75
      %p77 = scmp.ne.s32.totalorder %s66, %s69
      %p78 = scmp.eq.s32.totalorder %s21, 1
      %p79 = por %p77, %p78
      %p80 = scmp.ne.s32.totalorder %s69, %s70
      %p81 = scmp.eq.s32.totalorder %s21, 0
      %p82 = por %p80, %p81
      %p83 = scmp.ne.s32.totalorder %s69, %s70
      %p84 = scmp.eq.s32.totalorder %s22, 1
      %p85 = por %p83, %p84
      %p87 = scmp.ne.s32.totalorder %s70, %s86
      %p88 = scmp.eq.s32.totalorder %s22, 0
      %p89 = por %p87, %p88
      %s91 = sadd.s32 %s90, 1
      %p94 = scmp.eq.s32.totalorder %s16, 1
      %p95 = scmp.ne.s32.totalorder %s90, %s92
      %p96 = scmp.eq.s32.totalorder %s16, 0
      %p97 = por %p95, %p96
      %p98 = scmp.ne.s32.totalorder %s90, %s92
      %p99 = scmp.eq.s32.totalorder %s21, 1
      %p100 = por %p98, %p99
      %p101 = scmp.ne.s32.totalorder %s92, %s93
      %p102 = scmp.eq.s32.totalorder %s21, 0
      %p103 = por %p101, %p102
      %p104 = scmp.ne.s32.totalorder %s92, %s93
      %p105 = scmp.eq.s32.totalorder %s22, 1
      %p106 = por %p104, %p105
      %p108 = scmp.ne.s32.totalorder %s93, %s107
      %p109 = scmp.eq.s32.totalorder %s22, 0
      %p110 = por %p108, %p109
      %s112 = sadd.s32 %s111, 1
      %p115 = scmp.eq.s32.totalorder %s16, 1
      %p116 = scmp.ne.s32.totalorder %s111, %s113
      %p117 = scmp.eq.s32.totalorder %s16, 0
      %p118 = por %p116, %p117
      %p119 = scmp.ne.s32.totalorder %s111, %s113
      %p120 = scmp.eq.s32.totalorder %s21, 1
      %p121 = por %p119, %p120
      %p122 = scmp.ne.s32.totalorder %s113, %s114
      %p123 = scmp.eq.s32.totalorder %s21, 0
      %p124 = por %p122, %p123
      %p125 = scmp.ne.s32.totalorder %s113, %s114
      %p126 = scmp.eq.s32.totalorder %s22, 1
      %p127 = por %p125, %p126
      %p129 = scmp.ne.s32.totalorder %s114, %s128
      %p130 = scmp.eq.s32.totalorder %s22, 0
      %p131 = por %p129, %p130
      %s133 = sadd.s32 %s132, 1
      %p136 = scmp.eq.s32.totalorder %s16, 1
      %p137 = scmp.ne.s32.totalorder %s132, %s134
      %p138 = scmp.eq.s32.totalorder %s16, 0
      %p139 = por %p137, %p138
      %p140 = scmp.ne.s32.totalorder %s132, %s134
      %p141 = scmp.eq.s32.totalorder %s21, 1
      %p142 = por %p140, %p141
      %p143 = scmp.ne.s32.totalorder %s134, %s135
      %p144 = scmp.eq.s32.totalorder %s21, 0
      %p145 = por %p143, %p144
      %p146 = scmp.ne.s32.totalorder %s134, %s135
      %p147 = scmp.eq.s32.totalorder %s22, 1
      %p148 = por %p146, %p147
      %p150 = scmp.ne.s32.totalorder %s135, %s149
      %p151 = scmp.eq.s32.totalorder %s22, 0
      %p152 = por %p150, %p151
      %s154 = sadd.s32 %s153, 1
      %p157 = scmp.eq.s32.totalorder %s16, 1
      %p158 = scmp.ne.s32.totalorder %s153, %s155
      %p159 = scmp.eq.s32.totalorder %s16, 0
      %p160 = por %p158, %p159
      %p161 = scmp.ne.s32.totalorder %s153, %s155
      %p162 = scmp.eq.s32.totalorder %s21, 1
      %p163 = por %p161, %p162
      %p164 = scmp.ne.s32.totalorder %s155, %s156
      %p165 = scmp.eq.s32.totalorder %s21, 0
      %p166 = por %p164, %p165
      %p167 = scmp.ne.s32.totalorder %s155, %s156
      %p168 = scmp.eq.s32.totalorder %s22, 1
      %p169 = por %p167, %p168
      %p171 = scmp.ne.s32.totalorder %s156, %s170
      %p172 = scmp.eq.s32.totalorder %s22, 0
      %p173 = por %p171, %p172
      %s175 = sadd.s32 %s174, 1
      %p178 = scmp.eq.s32.totalorder %s16, 1
      %p179 = scmp.ne.s32.totalorder %s174, %s176
      %p180 = scmp.eq.s32.totalorder %s16, 0
      %p181 = por %p179, %p180
      %p182 = scmp.ne.s32.totalorder %s174, %s176
      %p183 = scmp.eq.s32.totalorder %s21, 1
      %p184 = por %p182, %p183
      %p185 = scmp.ne.s32.totalorder %s176, %s177
      %p186 = scmp.eq.s32.totalorder %s21, 0
      %p187 = por %p185, %p186
      %p188 = scmp.ne.s32.totalorder %s176, %s177
      %p189 = scmp.eq.s32.totalorder %s22, 1
      %p190 = por %p188, %p189
      %p192 = scmp.ne.s32.totalorder %s177, %s191
      %p193 = scmp.eq.s32.totalorder %s22, 0
      %p194 = por %p192, %p193
      %s195 = ssub.s32 %s23, %s35
      %s196 = ssub.s32 %s24, %s31
      %s197 = sor.u32 %s195, %s196
      %p198 = scmp.eq.s32.totalorder %s197, 0
      %s200 = sadd.s32 %s199, 1
      %s201 = scalar_select %p198, %s199, %s200
      %p204 = pneg %p198
      %p205 = scmp.eq.s32.totalorder %s16, 1
      %p206 = por %p204, %p205
      %p207 = scmp.ne.s32.totalorder %s199, %s202
      %p208 = scmp.eq.s32.totalorder %s16, 0
      %p209 = por %p207, %p208
      %p210 = scmp.ne.s32.totalorder %s199, %s202
      %p211 = scmp.eq.s32.totalorder %s21, 1
      %p212 = por %p210, %p211
      %p213 = scmp.ne.s32.totalorder %s202, %s203
      %p214 = scmp.eq.s32.totalorder %s21, 0
      %p215 = por %p213, %p214
      %p216 = scmp.ne.s32.totalorder %s202, %s203
      %p217 = scmp.eq.s32.totalorder %s22, 1
      %p218 = por %p216, %p217
      %p220 = scmp.ne.s32.totalorder %s203, %s219
      %p221 = scmp.eq.s32.totalorder %s22, 0
      %p222 = por %p220, %p221
      %p223 = scmp.le.s32.totalorder 1, %s16
      %p224 = scmp.lt.s32.totalorder %s16, 3
      %p225 = pnand %p223, %p224
      %p226 = pneg %p225
      // Predicated region
      $region9: #{tpu_custom_call.1} parent=5 // pred_check
        _
      $region10: #{tpu_custom_call.1} parent=5 // pred_check_branch
        %228 = sbr.rel (%p225) target = $region12
      $region11: #{tpu_custom_call.1} parent=5 // pred_region
        %s229 = ssub.s32 %s16, 1
        // Predicated region
        $region13: #{tpu_custom_call.1} parent=11 // pred_check
          %p230 = pneg %p103
        $region14: #{tpu_custom_call.1} parent=11 // pred_check_branch
          %232 = sbr.rel (%p230) target = $region16
        $region15: #{tpu_custom_call.1} parent=11 // pred_region
          _
        $region16: #{tpu_custom_call.1} parent=11 // pred_fallthru
          _
        // Predicated region
        $region17: #{tpu_custom_call.1} parent=11 // pred_check
          %p233 = pneg %p124
        $region18: #{tpu_custom_call.1} parent=11 // pred_check_branch
          %235 = sbr.rel (%p233) target = $region20
        $region19: #{tpu_custom_call.1} parent=11 // pred_region
          _
        $region20: #{tpu_custom_call.1} parent=11 // pred_fallthru
          _
        // Predicated region
        $region21: #{tpu_custom_call.1} parent=11 // pred_check
          %p236 = pneg %p145
        $region22: #{tpu_custom_call.1} parent=11 // pred_check_branch
          %238 = sbr.rel (%p236) target = $region24
        $region23: #{tpu_custom_call.1} parent=11 // pred_region
          _
        $region24: #{tpu_custom_call.1} parent=11 // pred_fallthru
          _
        // Predicated region
        $region25: #{tpu_custom_call.1} parent=11 // pred_check
          %p239 = pneg %p166
        $region26: #{tpu_custom_call.1} parent=11 // pred_check_branch
          %241 = sbr.rel (%p239) target = $region28
        $region27: #{tpu_custom_call.1} parent=11 // pred_region
          _
        $region28: #{tpu_custom_call.1} parent=11 // pred_fallthru
          _
        // Predicated region
        $region29: #{tpu_custom_call.1} parent=11 // pred_check
          %p242 = pneg %p187
        $region30: #{tpu_custom_call.1} parent=11 // pred_check_branch
          %244 = sbr.rel (%p242) target = $region32
        $region31: #{tpu_custom_call.1} parent=11 // pred_region
          _
        $region32: #{tpu_custom_call.1} parent=11 // pred_fallthru
          _
      $region12: #{tpu_custom_call.1} parent=5 // pred_fallthru
        _
      %p245 = scmp.lt.s32.totalorder %s16, 2
      // Predicated region
      $region33: #{tpu_custom_call.1} parent=5 // pred_check
        %p246 = pneg %p245
      $region34: #{tpu_custom_call.1} parent=5 // pred_check_branch
        %248 = sbr.rel (%p246) target = $region36
      $region35: #{tpu_custom_call.1} parent=5 // pred_region
        // Predicated region
        $region37: #{tpu_custom_call.1} parent=35 // pred_check
          %p249 = pneg %p50
        $region38: #{tpu_custom_call.1} parent=35 // pred_check_branch
          %251 = sbr.rel (%p249) target = $region40
        $region39: #{tpu_custom_call.1} parent=35 // pred_region
          %s252 = smul.u32 2, %s24
          %p253 = scmp.lt.s32.totalorder %s23, 1
          %s254 = scalar_select %p253, %s23, 1
          %p255 = scmp.lt.s32.totalorder %s252, 1
          %s256 = scalar_select %p255, %s252, 1
          %s257 = smul.addr %s254, 2
          %s258 = sadd.s32 %s256, %s257
          %s259 = smul.addr %s258, 8
          %s260 = scalar_lea.vmem %s0, %s259
          %s261 = smul.u32 2, %s24
        $region40: #{tpu_custom_call.1} parent=35 // pred_fallthru
          _
        // Predicated region
        $region41: #{tpu_custom_call.1} parent=35 // pred_check
          %p262 = pneg %p76
        $region42: #{tpu_custom_call.1} parent=35 // pred_check_branch
          %264 = sbr.rel (%p262) target = $region44
        $region43: #{tpu_custom_call.1} parent=35 // pred_region
          %p265 = scmp.lt.s32.totalorder %s23, 1
          %s266 = scalar_select %p265, %s23, 1
          %s267 = smul.addr %s266, 8
          %s268 = scalar_lea.vmem %s1, %s267
        $region44: #{tpu_custom_call.1} parent=35 // pred_fallthru
          _
      $region36: #{tpu_custom_call.1} parent=5 // pred_fallthru
        _
      %p269 = scmp.le.s32.totalorder 1, %s16
      %p270 = scmp.lt.s32.totalorder %s16, 3
      %p271 = pnand %p269, %p270
      %p272 = pneg %p271
      // Predicated region
      $region45: #{tpu_custom_call.1} parent=5 // pred_check
        _
      $region46: #{tpu_custom_call.1} parent=5 // pred_check_branch
        %274 = sbr.rel (%p271) target = $region48
      $region47: #{tpu_custom_call.1} parent=5 // pred_region
        %s275 = ssub.s32 %s16, 1
        %s276 = smul.u32 2, %s26
        %p277 = scmp.lt.s32.totalorder %s25, 1
        %s278 = scalar_select %p277, %s25, 1
        %p279 = scmp.lt.s32.totalorder %s276, 1
        %s280 = scalar_select %p279, %s276, 1
        %s281 = smul.addr %s278, 2
        %s282 = sadd.s32 %s280, %s281
        %s283 = smul.addr %s282, 8
        %s284 = scalar_lea.vmem %s0, %s283
        %p285 = pneg %p56
        %p286 = pneg %p53
        %p287 = scmp.lt.s32.totalorder %s25, 1
        %s288 = scalar_select %p287, %s25, 1
        %s289 = smul.addr %s288, 8
        %s290 = scalar_lea.vmem %s1, %s289
        %p291 = pneg %p82
        %p292 = pneg %p79
        %p293 = pneg %p103
        %p294 = pneg %p100
        %p295 = pneg %p124
        %p296 = pneg %p121
        %p297 = pneg %p145
        %p298 = pneg %p142
        %p299 = pneg %p166
        %p300 = pneg %p163
        %p301 = pneg %p187
        %p302 = pneg %p184
        %p303 = pneg %p215
        %p304 = pneg %p212
        %s305 = sand.u32 %s202, 1
        %s306 = scalar_lea.sflag [#allocation3], %s305
        %s307 = sand.u32 %s202, 1
        %s308 = smul.addr %s307, 16
        %s309 = scalar_lea.vmem [#allocation2], %s308
        %s310 = smul.u32 2, %s26
        %p311 = scmp.lt.s32.totalorder %s25, 1
        %s312 = scalar_select %p311, %s25, 1
        %p313 = scmp.lt.s32.totalorder %s310, 1
        %s314 = scalar_select %p313, %s310, 1
        %s315 = smul.addr %s312, 2
        %s316 = sadd.s32 %s314, %s315
        %s317 = smul.addr %s316, 8
        %s318 = scalar_lea.vmem %s0, %s317
        %s319 = smul.u32 2, %s26
        %p320 = scmp.lt.s32.totalorder %s25, 1
        %s321 = scalar_select %p320, %s25, 1
        %s322 = smul.addr %s321, 8
        %s323 = scalar_lea.vmem %s1, %s322
        %s324 = smul.u32 2, %s26
        %v325 = vld [vmem:[%s318] sm:$0xff]
        %v326 = vld [vmem:[%s318 + $0x8] sm:$0xff]
        %v327 = vld [vmem:[%s323] sm:$0xff]
        %v328 = vld [vmem:[%s2] sm:$0xff]
        %v329 = vld [vmem:[%s2 + $0x8] sm:$0xff]
        %v330 = vld [vmem:[%s2 + $0x10] sm:$0xff]
        %v331 = vld [vmem:[%s2 + $0x18] sm:$0xff]
        %v332 = vld [vmem:[%s2 + $0x20] sm:$0xff]
        %v333 = vld [vmem:[%s2 + $0x28] sm:$0xff]
        %v334 = vld [vmem:[%s2 + $0x30] sm:$0xff]
        %v335 = vld [vmem:[%s2 + $0x38] sm:$0xff]
        %v336 = vld [vmem:[%s2 + $0x40] sm:$0xff]
        %v337 = vld [vmem:[%s2 + $0x48] sm:$0xff]
        %v338 = vld [vmem:[%s2 + $0x50] sm:$0xff]
        %v339 = vld [vmem:[%s2 + $0x58] sm:$0xff]
        %v340 = vld [vmem:[%s2 + $0x60] sm:$0xff]
        %v341 = vld [vmem:[%s2 + $0x68] sm:$0xff]
        %v342 = vld [vmem:[%s2 + $0x70] sm:$0xff]
        %v343 = vld [vmem:[%s2 + $0x78] sm:$0xff]
        %344 = vmatprep.subr.mxu0 0.0
        %345 = vmatpush1.msra.mxu0 %v328
        %346 = vmatprep.subr.mxu0 0.0
        %347 = vmatpush1.msra.mxu0 %v329
        %348 = vmatprep.subr.mxu0 0.0
        %349 = vmatpush1.msra.mxu0 %v330
        %350 = vmatprep.subr.mxu0 0.0
        %351 = vmatpush1.msra.mxu0 %v331
        %352 = vmatprep.subr.mxu0 0.0
        %353 = vmatpush1.msra.mxu0 %v332
        %354 = vmatprep.subr.mxu0 0.0
        %355 = vmatpush1.msra.mxu0 %v333
        %356 = vmatprep.subr.mxu0 0.0
        %357 = vmatpush1.msra.mxu0 %v334
        %358 = vmatprep.subr.mxu0 0.0
        %359 = vmatpush1.msra.mxu0 %v335
        %360 = vmatprep.subr.mxu0 0.0
        %361 = vmatpush1.msra.mxu0 %v336
        %362 = vmatprep.subr.mxu0 0.0
        %363 = vmatpush1.msra.mxu0 %v337
        %364 = vmatprep.subr.mxu0 0.0
        %365 = vmatpush1.msra.mxu0 %v338
        %366 = vmatprep.subr.mxu0 0.0
        %367 = vmatpush1.msra.mxu0 %v339
        %368 = vmatprep.subr.mxu0 0.0
        %369 = vmatpush1.msra.mxu0 %v340
        %370 = vmatprep.subr.mxu0 0.0
        %371 = vmatpush1.msra.mxu0 %v341
        %372 = vmatprep.subr.mxu0 0.0
        %373 = vmatpush1.msra.mxu0 %v342
        %374 = vmatprep.subr.mxu0 0.0
        %375 = vmatpush1.msra.mxu0 %v343
        %376 = vmatprep.subr.mxu0 0.0
        %377 = vmatpush1.msra.mxu0 0.0
        %378 = vmatprep.subr.mxu0 0.0
        %379 = vmatpush1.msra.mxu0 0.0
        %380 = vmatprep.subr.mxu0 0.0
        %381 = vmatpush1.msra.mxu0 0.0
        %382 = vmatprep.subr.mxu0 0.0
        %383 = vmatpush1.msra.mxu0 0.0
        %384 = vmatprep.subr.mxu0 0.0
        %385 = vmatpush1.msra.mxu0 0.0
        %386 = vmatprep.subr.mxu0 0.0
        %387 = vmatpush1.msra.mxu0 0.0
        %388 = vmatprep.subr.mxu0 0.0
        %389 = vmatpush1.msra.mxu0 0.0
        %390 = vmatprep.subr.mxu0 0.0
        %391 = vmatpush1.msra.mxu0 0.0
        %392 = vmatprep.subr.mxu0 0.0
        %393 = vmatpush1.msra.mxu0 0.0
        %394 = vmatprep.subr.mxu0 0.0
        %395 = vmatpush1.msra.mxu0 0.0
        %396 = vmatprep.subr.mxu0 0.0
        %397 = vmatpush1.msra.mxu0 0.0
        %398 = vmatprep.subr.mxu0 0.0
        %399 = vmatpush1.msra.mxu0 0.0
        %400 = vmatprep.subr.mxu0 0.0
        %401 = vmatpush1.msra.mxu0 0.0
        %402 = vmatprep.subr.mxu0 0.0
        %403 = vmatpush1.msra.mxu0 0.0
        %404 = vmatprep.subr.mxu0 0.0
        %405 = vmatpush1.msra.mxu0 0.0
        %406 = vmatprep.subr.mxu0 0.0
        %407 = vmatpush1.msra.mxu0 0.0
        %408 = vmatprep.mubr.f32.mxu0 0.0
        %409 = vmatmul.mubr.f32.gmra.mrb[0].mxu0 %v325
        %v410 = vpop.f32.mrb[0].mxu0
        %v411 = vadd.f32 0.0, %v410
        %v412 = vpop.f32.mrb[0].mxu0
        %413 = vmatprep.mubr.f32.mxu0 0.0
        %414 = vmatmul.mubr.f32.gmra.mrb[0].mxu0 %v326
        %v415 = vpop.f32.mrb[0].mxu0
        %v416 = vadd.f32 0.0, %v415
        %v417 = vpop.f32.mrb[0].mxu0
        %418 = vdwg.mxu0
        %v419 = vld [vmem:[%s3] sm:$0xff]
        %v420 = vld [vmem:[%s3 + $0x8] sm:$0xff]
        %v421 = vld [vmem:[%s3 + $0x10] sm:$0xff]
        %v422 = vld [vmem:[%s3 + $0x18] sm:$0xff]
        %v423 = vld [vmem:[%s3 + $0x20] sm:$0xff]
        %v424 = vld [vmem:[%s3 + $0x28] sm:$0xff]
        %v425 = vld [vmem:[%s3 + $0x30] sm:$0xff]
        %v426 = vld [vmem:[%s3 + $0x38] sm:$0xff]
        %v427 = vld [vmem:[%s3 + $0x40] sm:$0xff]
        %v428 = vld [vmem:[%s3 + $0x48] sm:$0xff]
        %v429 = vld [vmem:[%s3 + $0x50] sm:$0xff]
        %v430 = vld [vmem:[%s3 + $0x58] sm:$0xff]
        %v431 = vld [vmem:[%s3 + $0x60] sm:$0xff]
        %v432 = vld [vmem:[%s3 + $0x68] sm:$0xff]
        %v433 = vld [vmem:[%s3 + $0x70] sm:$0xff]
        %v434 = vld [vmem:[%s3 + $0x78] sm:$0xff]
        %435 = vmatprep.subr.mxu0 0.0
        %436 = vmatpush1.msra.mxu0 %v419
        %437 = vmatprep.subr.mxu0 0.0
        %438 = vmatpush1.msra.mxu0 %v420
        %439 = vmatprep.subr.mxu0 0.0
        %440 = vmatpush1.msra.mxu0 %v421
        %441 = vmatprep.subr.mxu0 0.0
        %442 = vmatpush1.msra.mxu0 %v422
        %443 = vmatprep.subr.mxu0 0.0
        %444 = vmatpush1.msra.mxu0 %v423
        %445 = vmatprep.subr.mxu0 0.0
        %446 = vmatpush1.msra.mxu0 %v424
        %447 = vmatprep.subr.mxu0 0.0
        %448 = vmatpush1.msra.mxu0 %v425
        %449 = vmatprep.subr.mxu0 0.0
        %450 = vmatpush1.msra.mxu0 %v426
        %451 = vmatprep.subr.mxu0 0.0
        %452 = vmatpush1.msra.mxu0 %v427
        %453 = vmatprep.subr.mxu0 0.0
        %454 = vmatpush1.msra.mxu0 %v428
        %455 = vmatprep.subr.mxu0 0.0
        %456 = vmatpush1.msra.mxu0 %v429
        %457 = vmatprep.subr.mxu0 0.0
        %458 = vmatpush1.msra.mxu0 %v430
        %459 = vmatprep.subr.mxu0 0.0
        %460 = vmatpush1.msra.mxu0 %v431
        %461 = vmatprep.subr.mxu0 0.0
        %462 = vmatpush1.msra.mxu0 %v432
        %463 = vmatprep.subr.mxu0 0.0
        %464 = vmatpush1.msra.mxu0 %v433
        %465 = vmatprep.subr.mxu0 0.0
        %466 = vmatpush1.msra.mxu0 %v434
        %467 = vmatprep.subr.mxu0 0.0
        %468 = vmatpush1.msra.mxu0 0.0
        %469 = vmatprep.subr.mxu0 0.0
        %470 = vmatpush1.msra.mxu0 0.0
        %471 = vmatprep.subr.mxu0 0.0
        %472 = vmatpush1.msra.mxu0 0.0
        %473 = vmatprep.subr.mxu0 0.0
        %474 = vmatpush1.msra.mxu0 0.0
        %475 = vmatprep.subr.mxu0 0.0
        %476 = vmatpush1.msra.mxu0 0.0
        %477 = vmatprep.subr.mxu0 0.0
        %478 = vmatpush1.msra.mxu0 0.0
        %479 = vmatprep.subr.mxu0 0.0
        %480 = vmatpush1.msra.mxu0 0.0
        %481 = vmatprep.subr.mxu0 0.0
        %482 = vmatpush1.msra.mxu0 0.0
        %483 = vmatprep.subr.mxu0 0.0
        %484 = vmatpush1.msra.mxu0 0.0
        %485 = vmatprep.subr.mxu0 0.0
        %486 = vmatpush1.msra.mxu0 0.0
        %487 = vmatprep.subr.mxu0 0.0
        %488 = vmatpush1.msra.mxu0 0.0
        %489 = vmatprep.subr.mxu0 0.0
        %490 = vmatpush1.msra.mxu0 0.0
        %491 = vmatprep.subr.mxu0 0.0
        %492 = vmatpush1.msra.mxu0 0.0
        %493 = vmatprep.subr.mxu0 0.0
        %494 = vmatpush1.msra.mxu0 0.0
        %495 = vmatprep.subr.mxu0 0.0
        %496 = vmatpush1.msra.mxu0 0.0
        %497 = vmatprep.subr.mxu0 0.0
        %498 = vmatpush1.msra.mxu0 0.0
        %499 = vmatprep.mubr.f32.mxu0 0.0
        %500 = vmatmul.mubr.f32.gmra.mrb[0].mxu0 %v327
        %v501 = vpop.f32.mrb[0].mxu0
        %v502 = vadd.f32 0.0, %v501
        %v503 = vpop.f32.mrb[0].mxu0
        %504 = vdwg.mxu0
        %v505 = vld [vmem:[%s4] sm:$0xff]
        %v506 = vld [vmem:[%s4 + $0x8] sm:$0xff]
        %v507 = vld [vmem:[%s4 + $0x10] sm:$0xff]
        %v508 = vld [vmem:[%s4 + $0x18] sm:$0xff]
        %v509 = vld [vmem:[%s4 + $0x20] sm:$0xff]
        %v510 = vld [vmem:[%s4 + $0x28] sm:$0xff]
        %v511 = vld [vmem:[%s4 + $0x30] sm:$0xff]
        %v512 = vld [vmem:[%s4 + $0x38] sm:$0xff]
        %v513 = vld [vmem:[%s4 + $0x40] sm:$0xff]
        %v514 = vld [vmem:[%s4 + $0x48] sm:$0xff]
        %v515 = vld [vmem:[%s4 + $0x50] sm:$0xff]
        %v516 = vld [vmem:[%s4 + $0x58] sm:$0xff]
        %v517 = vld [vmem:[%s4 + $0x60] sm:$0xff]
        %v518 = vld [vmem:[%s4 + $0x68] sm:$0xff]
        %v519 = vld [vmem:[%s4 + $0x70] sm:$0xff]
        %v520 = vld [vmem:[%s4 + $0x78] sm:$0xff]
        %521 = vmatprep.subr.mxu0 0.0
        %522 = vmatpush1.msra.mxu0 %v505
        %523 = vmatprep.subr.mxu0 0.0
        %524 = vmatpush1.msra.mxu0 %v506
        %525 = vmatprep.subr.mxu0 0.0
        %526 = vmatpush1.msra.mxu0 %v507
        %527 = vmatprep.subr.mxu0 0.0
        %528 = vmatpush1.msra.mxu0 %v508
        %529 = vmatprep.subr.mxu0 0.0
        %530 = vmatpush1.msra.mxu0 %v509
        %531 = vmatprep.subr.mxu0 0.0
        %532 = vmatpush1.msra.mxu0 %v510
        %533 = vmatprep.subr.mxu0 0.0
        %534 = vmatpush1.msra.mxu0 %v511
        %535 = vmatprep.subr.mxu0 0.0
        %536 = vmatpush1.msra.mxu0 %v512
        %537 = vmatprep.subr.mxu0 0.0
        %538 = vmatpush1.msra.mxu0 %v513
        %539 = vmatprep.subr.mxu0 0.0
        %540 = vmatpush1.msra.mxu0 %v514
        %541 = vmatprep.subr.mxu0 0.0
        %542 = vmatpush1.msra.mxu0 %v515
        %543 = vmatprep.subr.mxu0 0.0
        %544 = vmatpush1.msra.mxu0 %v516
        %545 = vmatprep.subr.mxu0 0.0
        %546 = vmatpush1.msra.mxu0 %v517
        %547 = vmatprep.subr.mxu0 0.0
        %548 = vmatpush1.msra.mxu0 %v518
        %549 = vmatprep.subr.mxu0 0.0
        %550 = vmatpush1.msra.mxu0 %v519
        %551 = vmatprep.subr.mxu0 0.0
        %552 = vmatpush1.msra.mxu0 %v520
        %553 = vmatprep.subr.mxu0 0.0
        %554 = vmatpush1.msra.mxu0 0.0
        %555 = vmatprep.subr.mxu0 0.0
        %556 = vmatpush1.msra.mxu0 0.0
        %557 = vmatprep.subr.mxu0 0.0
        %558 = vmatpush1.msra.mxu0 0.0
        %559 = vmatprep.subr.mxu0 0.0
        %560 = vmatpush1.msra.mxu0 0.0
        %561 = vmatprep.subr.mxu0 0.0
        %562 = vmatpush1.msra.mxu0 0.0
        %563 = vmatprep.subr.mxu0 0.0
        %564 = vmatpush1.msra.mxu0 0.0
        %565 = vmatprep.subr.mxu0 0.0
        %566 = vmatpush1.msra.mxu0 0.0
        %567 = vmatprep.subr.mxu0 0.0
        %568 = vmatpush1.msra.mxu0 0.0
        %569 = vmatprep.subr.mxu0 0.0
        %570 = vmatpush1.msra.mxu0 0.0
        %571 = vmatprep.subr.mxu0 0.0
        %572 = vmatpush1.msra.mxu0 0.0
        %573 = vmatprep.subr.mxu0 0.0
        %574 = vmatpush1.msra.mxu0 0.0
        %575 = vmatprep.subr.mxu0 0.0
        %576 = vmatpush1.msra.mxu0 0.0
        %577 = vmatprep.subr.mxu0 0.0
        %578 = vmatpush1.msra.mxu0 0.0
        %579 = vmatprep.subr.mxu0 0.0
        %580 = vmatpush1.msra.mxu0 0.0
        %581 = vmatprep.subr.mxu0 0.0
        %582 = vmatpush1.msra.mxu0 0.0
        %583 = vmatprep.subr.mxu0 0.0
        %584 = vmatpush1.msra.mxu0 0.0
        %585 = vmatprep.mubr.f32.mxu0 0.0
        %586 = vmatmul.mubr.f32.gmra.mrb[0].mxu0 %v327
        %v587 = vpop.f32.mrb[0].mxu0
        %v588 = vadd.f32 0.0, %v587
        %v589 = vpop.f32.mrb[0].mxu0
        %590 = vdwg.mxu0
        %593 = vrot.lane.b32.xlu0 %v411, 120
        %v594 = vpop.permute.xlu0 %593
        %595 = vrot.lane.b32.xlu0 %v416, 120
        %v596 = vpop.permute.xlu0 %595
        %597 = vrot.lane.b32.xlu0 %v411, 112
        %v598 = vpop.permute.xlu0 %597
        %599 = vrot.lane.b32.xlu0 %v416, 112
        %v600 = vpop.permute.xlu0 %599
        %601 = vrot.lane.b32.xlu0 %v411, 104
        %v602 = vpop.permute.xlu0 %601
        %603 = vrot.lane.b32.xlu0 %v416, 104
        %v604 = vpop.permute.xlu0 %603
        %606 = vrot.lane.b32.xlu0 %v502, 120
        %v607 = vpop.permute.xlu0 %606
        %608 = vrot.lane.b32.xlu0 %v502, 112
        %v609 = vpop.permute.xlu0 %608
        %610 = vrot.lane.b32.xlu0 %v502, 104
        %v611 = vpop.permute.xlu0 %610
        %613 = vrot.lane.b32.xlu0 %v588, 120
        %v614 = vpop.permute.xlu0 %613
        %616 = vrot.lane.b32.xlu0 %v588, 112
        %v617 = vpop.permute.xlu0 %616
        %619 = vrot.lane.b32.xlu0 %v588, 104
        %v620 = vpop.permute.xlu0 %619
        %vm622 = vcmask 64512
        %v623 = vsel %vm622, %v411, 0
        %v625 = vsel %vm622, %v416, 0
        %v627 = vsel %vm622, %v502, 0
        %629 = vmatprep.subr.mxu0 0.0
        %630 = vmatpush1.xpose.msra.mxu0 %v627
        %631 = vmatprep.subr.mxu0 0.0
        %632 = vmatpush1.xpose.msra.mxu0 0.0
        %633 = vmatprep.subr.mxu0 0.0
        %634 = vmatpush1.xpose.msra.mxu0 0.0
        %635 = vmatprep.subr.mxu0 0.0
        %636 = vmatpush1.xpose.msra.mxu0 0.0
        %637 = vmatprep.subr.mxu0 0.0
        %638 = vmatpush1.xpose.msra.mxu0 0.0
        %639 = vmatprep.subr.mxu0 0.0
        %640 = vmatpush1.xpose.msra.mxu0 0.0
        %641 = vmatprep.subr.mxu0 0.0
        %642 = vmatpush1.xpose.msra.mxu0 0.0
        %643 = vmatprep.subr.mxu0 0.0
        %644 = vmatpush1.xpose.msra.mxu0 0.0
        %645 = vmatprep.subr.mxu0 0.0
        %646 = vmatpush1.xpose.msra.mxu0 0.0
        %647 = vmatprep.subr.mxu0 0.0
        %648 = vmatpush1.xpose.msra.mxu0 0.0
        %649 = vmatprep.subr.mxu0 0.0
        %650 = vmatpush1.xpose.msra.mxu0 0.0
        %651 = vmatprep.subr.mxu0 0.0
        %652 = vmatpush1.xpose.msra.mxu0 0.0
        %653 = vmatprep.subr.mxu0 0.0
        %654 = vmatpush1.xpose.msra.mxu0 0.0
        %655 = vmatprep.subr.mxu0 0.0
        %656 = vmatpush1.xpose.msra.mxu0 0.0
        %657 = vmatprep.subr.mxu0 0.0
        %658 = vmatpush1.xpose.msra.mxu0 0.0
        %659 = vmatprep.subr.mxu0 0.0
        %660 = vmatpush1.xpose.msra.mxu0 0.0
        %661 = vmatprep.subr.mxu0 0.0
        %662 = vmatpush1.xpose.msra.mxu0 0.0
        %663 = vmatprep.subr.mxu0 0.0
        %664 = vmatpush1.xpose.msra.mxu0 0.0
        %665 = vmatprep.subr.mxu0 0.0
        %666 = vmatpush1.xpose.msra.mxu0 0.0
        %667 = vmatprep.subr.mxu0 0.0
        %668 = vmatpush1.xpose.msra.mxu0 0.0
        %669 = vmatprep.subr.mxu0 0.0
        %670 = vmatpush1.xpose.msra.mxu0 0.0
        %671 = vmatprep.subr.mxu0 0.0
        %672 = vmatpush1.xpose.msra.mxu0 0.0
        %673 = vmatprep.subr.mxu0 0.0
        %674 = vmatpush1.xpose.msra.mxu0 0.0
        %675 = vmatprep.subr.mxu0 0.0
        %676 = vmatpush1.xpose.msra.mxu0 0.0
        %677 = vmatprep.subr.mxu0 0.0
        %678 = vmatpush1.xpose.msra.mxu0 0.0
        %679 = vmatprep.subr.mxu0 0.0
        %680 = vmatpush1.xpose.msra.mxu0 0.0
        %681 = vmatprep.subr.mxu0 0.0
        %682 = vmatpush1.xpose.msra.mxu0 0.0
        %683 = vmatprep.subr.mxu0 0.0
        %684 = vmatpush1.xpose.msra.mxu0 0.0
        %685 = vmatprep.subr.mxu0 0.0
        %686 = vmatpush1.xpose.msra.mxu0 0.0
        %687 = vmatprep.subr.mxu0 0.0
        %688 = vmatpush1.xpose.msra.mxu0 0.0
        %689 = vmatprep.subr.mxu0 0.0
        %690 = vmatpush1.xpose.msra.mxu0 0.0
        %691 = vmatprep.subr.mxu0 0.0
        %692 = vmatpush1.xpose.msra.mxu0 0.0
        %693 = vmatprep.mubr.f32.mxu0 0.0
        %694 = vmatmul.mubr.f32.gmra.mrb[0].mxu0 %v623
        %v695 = vpop.f32.mrb[0].mxu0
        %v696 = vadd.f32 0.0, %v695
        %v697 = vpop.f32.mrb[0].mxu0
        %698 = vmatprep.mubr.f32.mxu0 0.0
        %699 = vmatmul.mubr.f32.gmra.mrb[0].mxu0 %v625
        %v700 = vpop.f32.mrb[0].mxu0
        %v701 = vadd.f32 0.0, %v700
        %v702 = vpop.f32.mrb[0].mxu0
        %703 = vdwg.mxu0
        %v704 = vsel %vm622, %v594, 0
        %v706 = vsel %vm622, %v596, 0
        %v708 = vsel %vm622, %v607, 0
        %710 = vmatprep.subr.mxu0 0.0
        %711 = vmatpush1.xpose.msra.mxu0 %v708
        %712 = vmatprep.subr.mxu0 0.0
        %713 = vmatpush1.xpose.msra.mxu0 0.0
        %714 = vmatprep.subr.mxu0 0.0
        %715 = vmatpush1.xpose.msra.mxu0 0.0
        %716 = vmatprep.subr.mxu0 0.0
        %717 = vmatpush1.xpose.msra.mxu0 0.0
        %718 = vmatprep.subr.mxu0 0.0
        %719 = vmatpush1.xpose.msra.mxu0 0.0
        %720 = vmatprep.subr.mxu0 0.0
        %721 = vmatpush1.xpose.msra.mxu0 0.0
        %722 = vmatprep.subr.mxu0 0.0
        %723 = vmatpush1.xpose.msra.mxu0 0.0
        %724 = vmatprep.subr.mxu0 0.0
        %725 = vmatpush1.xpose.msra.mxu0 0.0
        %726 = vmatprep.subr.mxu0 0.0
        %727 = vmatpush1.xpose.msra.mxu0 0.0
        %728 = vmatprep.subr.mxu0 0.0
        %729 = vmatpush1.xpose.msra.mxu0 0.0
        %730 = vmatprep.subr.mxu0 0.0
        %731 = vmatpush1.xpose.msra.mxu0 0.0
        %732 = vmatprep.subr.mxu0 0.0
        %733 = vmatpush1.xpose.msra.mxu0 0.0
        %734 = vmatprep.subr.mxu0 0.0
        %735 = vmatpush1.xpose.msra.mxu0 0.0
        %736 = vmatprep.subr.mxu0 0.0
        %737 = vmatpush1.xpose.msra.mxu0 0.0
        %738 = vmatprep.subr.mxu0 0.0
        %739 = vmatpush1.xpose.msra.mxu0 0.0
        %740 = vmatprep.subr.mxu0 0.0
        %741 = vmatpush1.xpose.msra.mxu0 0.0
        %742 = vmatprep.subr.mxu0 0.0
        %743 = vmatpush1.xpose.msra.mxu0 0.0
        %744 = vmatprep.subr.mxu0 0.0
        %745 = vmatpush1.xpose.msra.mxu0 0.0
        %746 = vmatprep.subr.mxu0 0.0
        %747 = vmatpush1.xpose.msra.mxu0 0.0
        %748 = vmatprep.subr.mxu0 0.0
        %749 = vmatpush1.xpose.msra.mxu0 0.0
        %750 = vmatprep.subr.mxu0 0.0
        %751 = vmatpush1.xpose.msra.mxu0 0.0
        %752 = vmatprep.subr.mxu0 0.0
        %753 = vmatpush1.xpose.msra.mxu0 0.0
        %754 = vmatprep.subr.mxu0 0.0
        %755 = vmatpush1.xpose.msra.mxu0 0.0
        %756 = vmatprep.subr.mxu0 0.0
        %757 = vmatpush1.xpose.msra.mxu0 0.0
        %758 = vmatprep.subr.mxu0 0.0
        %759 = vmatpush1.xpose.msra.mxu0 0.0
        %760 = vmatprep.subr.mxu0 0.0
        %761 = vmatpush1.xpose.msra.mxu0 0.0
        %762 = vmatprep.subr.mxu0 0.0
        %763 = vmatpush1.xpose.msra.mxu0 0.0
        %764 = vmatprep.subr.mxu0 0.0
        %765 = vmatpush1.xpose.msra.mxu0 0.0
        %766 = vmatprep.subr.mxu0 0.0
        %767 = vmatpush1.xpose.msra.mxu0 0.0
        %768 = vmatprep.subr.mxu0 0.0
        %769 = vmatpush1.xpose.msra.mxu0 0.0
        %770 = vmatprep.subr.mxu0 0.0
        %771 = vmatpush1.xpose.msra.mxu0 0.0
        %772 = vmatprep.subr.mxu0 0.0
        %773 = vmatpush1.xpose.msra.mxu0 0.0
        %774 = vmatprep.mubr.f32.mxu0 0.0
        %775 = vmatmul.mubr.f32.gmra.mrb[0].mxu0 %v704
        %v776 = vpop.f32.mrb[0].mxu0
        %v777 = vadd.f32 0.0, %v776
        %v778 = vpop.f32.mrb[0].mxu0
        %779 = vmatprep.mubr.f32.mxu0 0.0
        %780 = vmatmul.mubr.f32.gmra.mrb[0].mxu0 %v706
        %v781 = vpop.f32.mrb[0].mxu0
        %v782 = vadd.f32 0.0, %v781
        %v783 = vpop.f32.mrb[0].mxu0
        %784 = vdwg.mxu0
        %v785 = vsel %vm622, %v598, 0
        %v787 = vsel %vm622, %v600, 0
        %v789 = vsel %vm622, %v609, 0
        %791 = vmatprep.subr.mxu0 0.0
        %792 = vmatpush1.xpose.msra.mxu0 %v789
        %793 = vmatprep.subr.mxu0 0.0
        %794 = vmatpush1.xpose.msra.mxu0 0.0
        %795 = vmatprep.subr.mxu0 0.0
        %796 = vmatpush1.xpose.msra.mxu0 0.0
        %797 = vmatprep.subr.mxu0 0.0
        %798 = vmatpush1.xpose.msra.mxu0 0.0
        %799 = vmatprep.subr.mxu0 0.0
        %800 = vmatpush1.xpose.msra.mxu0 0.0
        %801 = vmatprep.subr.mxu0 0.0
        %802 = vmatpush1.xpose.msra.mxu0 0.0
        %803 = vmatprep.subr.mxu0 0.0
        %804 = vmatpush1.xpose.msra.mxu0 0.0
        %805 = vmatprep.subr.mxu0 0.0
        %806 = vmatpush1.xpose.msra.mxu0 0.0
        %807 = vmatprep.subr.mxu0 0.0
        %808 = vmatpush1.xpose.msra.mxu0 0.0
        %809 = vmatprep.subr.mxu0 0.0
        %810 = vmatpush1.xpose.msra.mxu0 0.0
        %811 = vmatprep.subr.mxu0 0.0
        %812 = vmatpush1.xpose.msra.mxu0 0.0
        %813 = vmatprep.subr.mxu0 0.0
        %814 = vmatpush1.xpose.msra.mxu0 0.0
        %815 = vmatprep.subr.mxu0 0.0
        %816 = vmatpush1.xpose.msra.mxu0 0.0
        %817 = vmatprep.subr.mxu0 0.0
        %818 = vmatpush1.xpose.msra.mxu0 0.0
        %819 = vmatprep.subr.mxu0 0.0
        %820 = vmatpush1.xpose.msra.mxu0 0.0
        %821 = vmatprep.subr.mxu0 0.0
        %822 = vmatpush1.xpose.msra.mxu0 0.0
        %823 = vmatprep.subr.mxu0 0.0
        %824 = vmatpush1.xpose.msra.mxu0 0.0
        %825 = vmatprep.subr.mxu0 0.0
        %826 = vmatpush1.xpose.msra.mxu0 0.0
        %827 = vmatprep.subr.mxu0 0.0
        %828 = vmatpush1.xpose.msra.mxu0 0.0
        %829 = vmatprep.subr.mxu0 0.0
        %830 = vmatpush1.xpose.msra.mxu0 0.0
        %831 = vmatprep.subr.mxu0 0.0
        %832 = vmatpush1.xpose.msra.mxu0 0.0
        %833 = vmatprep.subr.mxu0 0.0
        %834 = vmatpush1.xpose.msra.mxu0 0.0
        %835 = vmatprep.subr.mxu0 0.0
        %836 = vmatpush1.xpose.msra.mxu0 0.0
        %837 = vmatprep.subr.mxu0 0.0
        %838 = vmatpush1.xpose.msra.mxu0 0.0
        %839 = vmatprep.subr.mxu0 0.0
        %840 = vmatpush1.xpose.msra.mxu0 0.0
        %841 = vmatprep.subr.mxu0 0.0
        %842 = vmatpush1.xpose.msra.mxu0 0.0
        %843 = vmatprep.subr.mxu0 0.0
        %844 = vmatpush1.xpose.msra.mxu0 0.0
        %845 = vmatprep.subr.mxu0 0.0
        %846 = vmatpush1.xpose.msra.mxu0 0.0
        %847 = vmatprep.subr.mxu0 0.0
        %848 = vmatpush1.xpose.msra.mxu0 0.0
        %849 = vmatprep.subr.mxu0 0.0
        %850 = vmatpush1.xpose.msra.mxu0 0.0
        %851 = vmatprep.subr.mxu0 0.0
        %852 = vmatpush1.xpose.msra.mxu0 0.0
        %853 = vmatprep.subr.mxu0 0.0
        %854 = vmatpush1.xpose.msra.mxu0 0.0
        %855 = vmatprep.mubr.f32.mxu0 0.0
        %856 = vmatmul.mubr.f32.gmra.mrb[0].mxu0 %v785
        %v857 = vpop.f32.mrb[0].mxu0
        %v858 = vadd.f32 0.0, %v857
        %v859 = vpop.f32.mrb[0].mxu0
        %860 = vmatprep.mubr.f32.mxu0 0.0
        %861 = vmatmul.mubr.f32.gmra.mrb[0].mxu0 %v787
        %v862 = vpop.f32.mrb[0].mxu0
        %v863 = vadd.f32 0.0, %v862
        %v864 = vpop.f32.mrb[0].mxu0
        %865 = vdwg.mxu0
        %v866 = vsel %vm622, %v602, 0
        %v868 = vsel %vm622, %v604, 0
        %v870 = vsel %vm622, %v611, 0
        %872 = vmatprep.subr.mxu0 0.0
        %873 = vmatpush1.xpose.msra.mxu0 %v870
        %874 = vmatprep.subr.mxu0 0.0
        %875 = vmatpush1.xpose.msra.mxu0 0.0
        %876 = vmatprep.subr.mxu0 0.0
        %877 = vmatpush1.xpose.msra.mxu0 0.0
        %878 = vmatprep.subr.mxu0 0.0
        %879 = vmatpush1.xpose.msra.mxu0 0.0
        %880 = vmatprep.subr.mxu0 0.0
        %881 = vmatpush1.xpose.msra.mxu0 0.0
        %882 = vmatprep.subr.mxu0 0.0
        %883 = vmatpush1.xpose.msra.mxu0 0.0
        %884 = vmatprep.subr.mxu0 0.0
        %885 = vmatpush1.xpose.msra.mxu0 0.0
        %886 = vmatprep.subr.mxu0 0.0
        %887 = vmatpush1.xpose.msra.mxu0 0.0
        %888 = vmatprep.subr.mxu0 0.0
        %889 = vmatpush1.xpose.msra.mxu0 0.0
        %890 = vmatprep.subr.mxu0 0.0
        %891 = vmatpush1.xpose.msra.mxu0 0.0
        %892 = vmatprep.subr.mxu0 0.0
        %893 = vmatpush1.xpose.msra.mxu0 0.0
        %894 = vmatprep.subr.mxu0 0.0
        %895 = vmatpush1.xpose.msra.mxu0 0.0
        %896 = vmatprep.subr.mxu0 0.0
        %897 = vmatpush1.xpose.msra.mxu0 0.0
        %898 = vmatprep.subr.mxu0 0.0
        %899 = vmatpush1.xpose.msra.mxu0 0.0
        %900 = vmatprep.subr.mxu0 0.0
        %901 = vmatpush1.xpose.msra.mxu0 0.0
        %902 = vmatprep.subr.mxu0 0.0
        %903 = vmatpush1.xpose.msra.mxu0 0.0
        %904 = vmatprep.subr.mxu0 0.0
        %905 = vmatpush1.xpose.msra.mxu0 0.0
        %906 = vmatprep.subr.mxu0 0.0
        %907 = vmatpush1.xpose.msra.mxu0 0.0
        %908 = vmatprep.subr.mxu0 0.0
        %909 = vmatpush1.xpose.msra.mxu0 0.0
        %910 = vmatprep.subr.mxu0 0.0
        %911 = vmatpush1.xpose.msra.mxu0 0.0
        %912 = vmatprep.subr.mxu0 0.0
        %913 = vmatpush1.xpose.msra.mxu0 0.0
        %914 = vmatprep.subr.mxu0 0.0
        %915 = vmatpush1.xpose.msra.mxu0 0.0
        %916 = vmatprep.subr.mxu0 0.0
        %917 = vmatpush1.xpose.msra.mxu0 0.0
        %918 = vmatprep.subr.mxu0 0.0
        %919 = vmatpush1.xpose.msra.mxu0 0.0
        %920 = vmatprep.subr.mxu0 0.0
        %921 = vmatpush1.xpose.msra.mxu0 0.0
        %922 = vmatprep.subr.mxu0 0.0
        %923 = vmatpush1.xpose.msra.mxu0 0.0
        %924 = vmatprep.subr.mxu0 0.0
        %925 = vmatpush1.xpose.msra.mxu0 0.0
        %926 = vmatprep.subr.mxu0 0.0
        %927 = vmatpush1.xpose.msra.mxu0 0.0
        %928 = vmatprep.subr.mxu0 0.0
        %929 = vmatpush1.xpose.msra.mxu0 0.0
        %930 = vmatprep.subr.mxu0 0.0
        %931 = vmatpush1.xpose.msra.mxu0 0.0
        %932 = vmatprep.subr.mxu0 0.0
        %933 = vmatpush1.xpose.msra.mxu0 0.0
        %934 = vmatprep.subr.mxu0 0.0
        %935 = vmatpush1.xpose.msra.mxu0 0.0
        %936 = vmatprep.mubr.f32.mxu0 0.0
        %937 = vmatmul.mubr.f32.gmra.mrb[0].mxu0 %v866
        %v938 = vpop.f32.mrb[0].mxu0
        %v939 = vadd.f32 0.0, %v938
        %v940 = vpop.f32.mrb[0].mxu0
        %941 = vmatprep.mubr.f32.mxu0 0.0
        %942 = vmatmul.mubr.f32.gmra.mrb[0].mxu0 %v868
        %v943 = vpop.f32.mrb[0].mxu0
        %v944 = vadd.f32 0.0, %v943
        %v945 = vpop.f32.mrb[0].mxu0
        %946 = vdwg.mxu0
        %v947 = vsel %vm622, %v696, -inf
        %948 = vmax.xlane.f32.xlu0 %v947
        %v949 = vpop.xlane.xlu0 %948
        %v950 = vsel %vm622, %v701, -inf
        %951 = vmax.xlane.f32.xlu0 %v950
        %v952 = vpop.xlane.xlu0 %951
        %v953 = vsel %vm622, %v777, -inf
        %954 = vmax.xlane.f32.xlu0 %v953
        %v955 = vpop.xlane.xlu0 %954
        %v956 = vsel %vm622, %v782, -inf
        %957 = vmax.xlane.f32.xlu0 %v956
        %v958 = vpop.xlane.xlu0 %957
        %v959 = vsel %vm622, %v858, -inf
        %960 = vmax.xlane.f32.xlu0 %v959
        %v961 = vpop.xlane.xlu0 %960
        %v962 = vsel %vm622, %v863, -inf
        %963 = vmax.xlane.f32.xlu0 %v962
        %v964 = vpop.xlane.xlu0 %963
        %v965 = vsel %vm622, %v939, -inf
        %966 = vmax.xlane.f32.xlu0 %v965
        %v967 = vpop.xlane.xlu0 %966
        %v968 = vsel %vm622, %v944, -inf
        %969 = vmax.xlane.f32.xlu0 %v968
        %v970 = vpop.xlane.xlu0 %969
        %v971 = vsub.f32 %v696, %v949
        %v972 = vsub.f32 %v701, %v952
        %v973 = vsub.f32 %v777, %v955
        %v974 = vsub.f32 %v782, %v958
        %v975 = vsub.f32 %v858, %v961
        %v976 = vsub.f32 %v863, %v964
        %v977 = vsub.f32 %v939, %v967
        %v978 = vsub.f32 %v944, %v970
        %v979 = vmul.f32 %v971, 1.442695
        %v980 = vpow.pop %v979
        %v981 = vmul.f32 %v972, 1.442695
        %v982 = vpow.pop %v981
        %v983 = vmul.f32 %v973, 1.442695
        %v984 = vpow.pop %v983
        %v985 = vmul.f32 %v974, 1.442695
        %v986 = vpow.pop %v985
        %v987 = vmul.f32 %v975, 1.442695
        %v988 = vpow.pop %v987
        %v989 = vmul.f32 %v976, 1.442695
        %v990 = vpow.pop %v989
        %v991 = vmul.f32 %v977, 1.442695
        %v992 = vpow.pop %v991
        %v993 = vmul.f32 %v978, 1.442695
        %v994 = vpow.pop %v993
        %v995 = vsel %vm622, %v980, 0.0
        %996 = vadd.xlane.f32.xlu0 %v995
        %v997 = vpop.xlane.xlu0 %996
        %v998 = vsel %vm622, %v982, 0.0
        %999 = vadd.xlane.f32.xlu0 %v998
        %v1000 = vpop.xlane.xlu0 %999
        %v1001 = vsel %vm622, %v984, 0.0
        %1002 = vadd.xlane.f32.xlu0 %v1001
        %v1003 = vpop.xlane.xlu0 %1002
        %v1004 = vsel %vm622, %v986, 0.0
        %1005 = vadd.xlane.f32.xlu0 %v1004
        %v1006 = vpop.xlane.xlu0 %1005
        %v1007 = vsel %vm622, %v988, 0.0
        %1008 = vadd.xlane.f32.xlu0 %v1007
        %v1009 = vpop.xlane.xlu0 %1008
        %v1010 = vsel %vm622, %v990, 0.0
        %1011 = vadd.xlane.f32.xlu0 %v1010
        %v1012 = vpop.xlane.xlu0 %1011
        %v1013 = vsel %vm622, %v992, 0.0
        %1014 = vadd.xlane.f32.xlu0 %v1013
        %v1015 = vpop.xlane.xlu0 %1014
        %v1016 = vsel %vm622, %v994, 0.0
        %1017 = vadd.xlane.f32.xlu0 %v1016
        %v1018 = vpop.xlane.xlu0 %1017
        %v1019 = vrcp.pop %v997
        %v1020 = vrcp.pop %v1000
        %v1021 = vrcp.pop %v1003
        %v1022 = vrcp.pop %v1006
        %v1023 = vrcp.pop %v1009
        %v1024 = vrcp.pop %v1012
        %v1025 = vrcp.pop %v1015
        %v1026 = vrcp.pop %v1018
        %v1027 = vmul.f32 %v980, %v1019
        %v1028 = vmul.f32 %v982, %v1020
        %v1029 = vmul.f32 %v984, %v1021
        %v1030 = vmul.f32 %v986, %v1022
        %v1031 = vmul.f32 %v988, %v1023
        %v1032 = vmul.f32 %v990, %v1024
        %v1033 = vmul.f32 %v992, %v1025
        %v1034 = vmul.f32 %v994, %v1026
        %v1036 = vsel %vm622, %v1027, 0
        %v1039 = vsel %vm622, %v1028, 0
        %1041 = vmatprep.subr.mxu0 0.0
        %1042 = vmatpush1.msra.mxu0 %v588
        %1043 = vmatprep.subr.mxu0 0.0
        %1044 = vmatpush1.msra.mxu0 0.0
        %1045 = vmatprep.subr.mxu0 0.0
        %1046 = vmatpush1.msra.mxu0 0.0
        %1047 = vmatprep.subr.mxu0 0.0
        %1048 = vmatpush1.msra.mxu0 0.0
        %1049 = vmatprep.subr.mxu0 0.0
        %1050 = vmatpush1.msra.mxu0 0.0
        %1051 = vmatprep.subr.mxu0 0.0
        %1052 = vmatpush1.msra.mxu0 0.0
        %1053 = vmatprep.subr.mxu0 0.0
        %1054 = vmatpush1.msra.mxu0 0.0
        %1055 = vmatprep.subr.mxu0 0.0
        %1056 = vmatpush1.msra.mxu0 0.0
        %1057 = vmatprep.subr.mxu0 0.0
        %1058 = vmatpush1.msra.mxu0 0.0
        %1059 = vmatprep.subr.mxu0 0.0
        %1060 = vmatpush1.msra.mxu0 0.0
        %1061 = vmatprep.subr.mxu0 0.0
        %1062 = vmatpush1.msra.mxu0 0.0
        %1063 = vmatprep.subr.mxu0 0.0
        %1064 = vmatpush1.msra.mxu0 0.0
        %1065 = vmatprep.subr.mxu0 0.0
        %1066 = vmatpush1.msra.mxu0 0.0
        %1067 = vmatprep.subr.mxu0 0.0
        %1068 = vmatpush1.msra.mxu0 0.0
        %1069 = vmatprep.subr.mxu0 0.0
        %1070 = vmatpush1.msra.mxu0 0.0
        %1071 = vmatprep.subr.mxu0 0.0
        %1072 = vmatpush1.msra.mxu0 0.0
        %1073 = vmatprep.subr.mxu0 0.0
        %1074 = vmatpush1.msra.mxu0 0.0
        %1075 = vmatprep.subr.mxu0 0.0
        %1076 = vmatpush1.msra.mxu0 0.0
        %1077 = vmatprep.subr.mxu0 0.0
        %1078 = vmatpush1.msra.mxu0 0.0
        %1079 = vmatprep.subr.mxu0 0.0
        %1080 = vmatpush1.msra.mxu0 0.0
        %1081 = vmatprep.subr.mxu0 0.0
        %1082 = vmatpush1.msra.mxu0 0.0
        %1083 = vmatprep.subr.mxu0 0.0
        %1084 = vmatpush1.msra.mxu0 0.0
        %1085 = vmatprep.subr.mxu0 0.0
        %1086 = vmatpush1.msra.mxu0 0.0
        %1087 = vmatprep.subr.mxu0 0.0
        %1088 = vmatpush1.msra.mxu0 0.0
        %1089 = vmatprep.subr.mxu0 0.0
        %1090 = vmatpush1.msra.mxu0 0.0
        %1091 = vmatprep.subr.mxu0 0.0
        %1092 = vmatpush1.msra.mxu0 0.0
        %1093 = vmatprep.subr.mxu0 0.0
        %1094 = vmatpush1.msra.mxu0 0.0
        %1095 = vmatprep.subr.mxu0 0.0
        %1096 = vmatpush1.msra.mxu0 0.0
        %1097 = vmatprep.subr.mxu0 0.0
        %1098 = vmatpush1.msra.mxu0 0.0
        %1099 = vmatprep.subr.mxu0 0.0
        %1100 = vmatpush1.msra.mxu0 0.0
        %1101 = vmatprep.subr.mxu0 0.0
        %1102 = vmatpush1.msra.mxu0 0.0
        %1103 = vmatprep.subr.mxu0 0.0
        %1104 = vmatpush1.msra.mxu0 0.0
        %1105 = vmatprep.mubr.f32.mxu0 0.0
        %1106 = vmatmul.mubr.f32.gmra.mrb[0].mxu0 %v1036
        %v1107 = vpop.f32.mrb[0].mxu0
        %v1108 = vadd.f32 0.0, %v1107
        %v1109 = vpop.f32.mrb[0].mxu0
        %1110 = vmatprep.mubr.f32.mxu0 0.0
        %1111 = vmatmul.mubr.f32.gmra.mrb[0].mxu0 %v1039
        %v1112 = vpop.f32.mrb[0].mxu0
        %v1113 = vadd.f32 0.0, %v1112
        %v1114 = vpop.f32.mrb[0].mxu0
        %1115 = vdwg.mxu0
        %v1117 = vsel %vm622, %v1029, 0
        %v1120 = vsel %vm622, %v1030, 0
        %1122 = vmatprep.subr.mxu0 0.0
        %1123 = vmatpush1.msra.mxu0 %v614
        %1124 = vmatprep.subr.mxu0 0.0
        %1125 = vmatpush1.msra.mxu0 0.0
        %1126 = vmatprep.subr.mxu0 0.0
        %1127 = vmatpush1.msra.mxu0 0.0
        %1128 = vmatprep.subr.mxu0 0.0
        %1129 = vmatpush1.msra.mxu0 0.0
        %1130 = vmatprep.subr.mxu0 0.0
        %1131 = vmatpush1.msra.mxu0 0.0
        %1132 = vmatprep.subr.mxu0 0.0
        %1133 = vmatpush1.msra.mxu0 0.0
        %1134 = vmatprep.subr.mxu0 0.0
        %1135 = vmatpush1.msra.mxu0 0.0
        %1136 = vmatprep.subr.mxu0 0.0
        %1137 = vmatpush1.msra.mxu0 0.0
        %1138 = vmatprep.subr.mxu0 0.0
        %1139 = vmatpush1.msra.mxu0 0.0
        %1140 = vmatprep.subr.mxu0 0.0
        %1141 = vmatpush1.msra.mxu0 0.0
        %1142 = vmatprep.subr.mxu0 0.0
        %1143 = vmatpush1.msra.mxu0 0.0
        %1144 = vmatprep.subr.mxu0 0.0
        %1145 = vmatpush1.msra.mxu0 0.0
        %1146 = vmatprep.subr.mxu0 0.0
        %1147 = vmatpush1.msra.mxu0 0.0
        %1148 = vmatprep.subr.mxu0 0.0
        %1149 = vmatpush1.msra.mxu0 0.0
        %1150 = vmatprep.subr.mxu0 0.0
        %1151 = vmatpush1.msra.mxu0 0.0
        %1152 = vmatprep.subr.mxu0 0.0
        %1153 = vmatpush1.msra.mxu0 0.0
        %1154 = vmatprep.subr.mxu0 0.0
        %1155 = vmatpush1.msra.mxu0 0.0
        %1156 = vmatprep.subr.mxu0 0.0
        %1157 = vmatpush1.msra.mxu0 0.0
        %1158 = vmatprep.subr.mxu0 0.0
        %1159 = vmatpush1.msra.mxu0 0.0
        %1160 = vmatprep.subr.mxu0 0.0
        %1161 = vmatpush1.msra.mxu0 0.0
        %1162 = vmatprep.subr.mxu0 0.0
        %1163 = vmatpush1.msra.mxu0 0.0
        %1164 = vmatprep.subr.mxu0 0.0
        %1165 = vmatpush1.msra.mxu0 0.0
        %1166 = vmatprep.subr.mxu0 0.0
        %1167 = vmatpush1.msra.mxu0 0.0
        %1168 = vmatprep.subr.mxu0 0.0
        %1169 = vmatpush1.msra.mxu0 0.0
        %1170 = vmatprep.subr.mxu0 0.0
        %1171 = vmatpush1.msra.mxu0 0.0
        %1172 = vmatprep.subr.mxu0 0.0
        %1173 = vmatpush1.msra.mxu0 0.0
        %1174 = vmatprep.subr.mxu0 0.0
        %1175 = vmatpush1.msra.mxu0 0.0
        %1176 = vmatprep.subr.mxu0 0.0
        %1177 = vmatpush1.msra.mxu0 0.0
        %1178 = vmatprep.subr.mxu0 0.0
        %1179 = vmatpush1.msra.mxu0 0.0
        %1180 = vmatprep.subr.mxu0 0.0
        %1181 = vmatpush1.msra.mxu0 0.0
        %1182 = vmatprep.subr.mxu0 0.0
        %1183 = vmatpush1.msra.mxu0 0.0
        %1184 = vmatprep.subr.mxu0 0.0
        %1185 = vmatpush1.msra.mxu0 0.0
        %1186 = vmatprep.mubr.f32.mxu0 0.0
        %1187 = vmatmul.mubr.f32.gmra.mrb[0].mxu0 %v1117
        %v1188 = vpop.f32.mrb[0].mxu0
        %v1189 = vadd.f32 0.0, %v1188
        %v1190 = vpop.f32.mrb[0].mxu0
        %1191 = vmatprep.mubr.f32.mxu0 0.0
        %1192 = vmatmul.mubr.f32.gmra.mrb[0].mxu0 %v1120
        %v1193 = vpop.f32.mrb[0].mxu0
        %v1194 = vadd.f32 0.0, %v1193
        %v1195 = vpop.f32.mrb[0].mxu0
        %1196 = vdwg.mxu0
        %v1198 = vsel %vm622, %v1031, 0
        %v1201 = vsel %vm622, %v1032, 0
        %1203 = vmatprep.subr.mxu0 0.0
        %1204 = vmatpush1.msra.mxu0 %v617
        %1205 = vmatprep.subr.mxu0 0.0
        %1206 = vmatpush1.msra.mxu0 0.0
        %1207 = vmatprep.subr.mxu0 0.0
        %1208 = vmatpush1.msra.mxu0 0.0
        %1209 = vmatprep.subr.mxu0 0.0
        %1210 = vmatpush1.msra.mxu0 0.0
        %1211 = vmatprep.subr.mxu0 0.0
        %1212 = vmatpush1.msra.mxu0 0.0
        %1213 = vmatprep.subr.mxu0 0.0
        %1214 = vmatpush1.msra.mxu0 0.0
        %1215 = vmatprep.subr.mxu0 0.0
        %1216 = vmatpush1.msra.mxu0 0.0
        %1217 = vmatprep.subr.mxu0 0.0
        %1218 = vmatpush1.msra.mxu0 0.0
        %1219 = vmatprep.subr.mxu0 0.0
        %1220 = vmatpush1.msra.mxu0 0.0
        %1221 = vmatprep.subr.mxu0 0.0
        %1222 = vmatpush1.msra.mxu0 0.0
        %1223 = vmatprep.subr.mxu0 0.0
        %1224 = vmatpush1.msra.mxu0 0.0
        %1225 = vmatprep.subr.mxu0 0.0
        %1226 = vmatpush1.msra.mxu0 0.0
        %1227 = vmatprep.subr.mxu0 0.0
        %1228 = vmatpush1.msra.mxu0 0.0
        %1229 = vmatprep.subr.mxu0 0.0
        %1230 = vmatpush1.msra.mxu0 0.0
        %1231 = vmatprep.subr.mxu0 0.0
        %1232 = vmatpush1.msra.mxu0 0.0
        %1233 = vmatprep.subr.mxu0 0.0
        %1234 = vmatpush1.msra.mxu0 0.0
        %1235 = vmatprep.subr.mxu0 0.0
        %1236 = vmatpush1.msra.mxu0 0.0
        %1237 = vmatprep.subr.mxu0 0.0
        %1238 = vmatpush1.msra.mxu0 0.0
        %1239 = vmatprep.subr.mxu0 0.0
        %1240 = vmatpush1.msra.mxu0 0.0
        %1241 = vmatprep.subr.mxu0 0.0
        %1242 = vmatpush1.msra.mxu0 0.0
        %1243 = vmatprep.subr.mxu0 0.0
        %1244 = vmatpush1.msra.mxu0 0.0
        %1245 = vmatprep.subr.mxu0 0.0
        %1246 = vmatpush1.msra.mxu0 0.0
        %1247 = vmatprep.subr.mxu0 0.0
        %1248 = vmatpush1.msra.mxu0 0.0
        %1249 = vmatprep.subr.mxu0 0.0
        %1250 = vmatpush1.msra.mxu0 0.0
        %1251 = vmatprep.subr.mxu0 0.0
        %1252 = vmatpush1.msra.mxu0 0.0
        %1253 = vmatprep.subr.mxu0 0.0
        %1254 = vmatpush1.msra.mxu0 0.0
        %1255 = vmatprep.subr.mxu0 0.0
        %1256 = vmatpush1.msra.mxu0 0.0
        %1257 = vmatprep.subr.mxu0 0.0
        %1258 = vmatpush1.msra.mxu0 0.0
        %1259 = vmatprep.subr.mxu0 0.0
        %1260 = vmatpush1.msra.mxu0 0.0
        %1261 = vmatprep.subr.mxu0 0.0
        %1262 = vmatpush1.msra.mxu0 0.0
        %1263 = vmatprep.subr.mxu0 0.0
        %1264 = vmatpush1.msra.mxu0 0.0
        %1265 = vmatprep.subr.mxu0 0.0
        %1266 = vmatpush1.msra.mxu0 0.0
        %1267 = vmatprep.mubr.f32.mxu0 0.0
        %1268 = vmatmul.mubr.f32.gmra.mrb[0].mxu0 %v1198
        %v1269 = vpop.f32.mrb[0].mxu0
        %v1270 = vadd.f32 0.0, %v1269
        %v1271 = vpop.f32.mrb[0].mxu0
        %1272 = vmatprep.mubr.f32.mxu0 0.0
        %1273 = vmatmul.mubr.f32.gmra.mrb[0].mxu0 %v1201
        %v1274 = vpop.f32.mrb[0].mxu0
        %v1275 = vadd.f32 0.0, %v1274
        %v1276 = vpop.f32.mrb[0].mxu0
        %1277 = vdwg.mxu0
        %v1279 = vsel %vm622, %v1033, 0
        %v1282 = vsel %vm622, %v1034, 0
        %1284 = vmatprep.subr.mxu0 0.0
        %1285 = vmatpush1.msra.mxu0 %v620
        %1286 = vmatprep.subr.mxu0 0.0
        %1287 = vmatpush1.msra.mxu0 0.0
        %1288 = vmatprep.subr.mxu0 0.0
        %1289 = vmatpush1.msra.mxu0 0.0
        %1290 = vmatprep.subr.mxu0 0.0
        %1291 = vmatpush1.msra.mxu0 0.0
        %1292 = vmatprep.subr.mxu0 0.0
        %1293 = vmatpush1.msra.mxu0 0.0
        %1294 = vmatprep.subr.mxu0 0.0
        %1295 = vmatpush1.msra.mxu0 0.0
        %1296 = vmatprep.subr.mxu0 0.0
        %1297 = vmatpush1.msra.mxu0 0.0
        %1298 = vmatprep.subr.mxu0 0.0
        %1299 = vmatpush1.msra.mxu0 0.0
        %1300 = vmatprep.subr.mxu0 0.0
        %1301 = vmatpush1.msra.mxu0 0.0
        %1302 = vmatprep.subr.mxu0 0.0
        %1303 = vmatpush1.msra.mxu0 0.0
        %1304 = vmatprep.subr.mxu0 0.0
        %1305 = vmatpush1.msra.mxu0 0.0
        %1306 = vmatprep.subr.mxu0 0.0
        %1307 = vmatpush1.msra.mxu0 0.0
        %1308 = vmatprep.subr.mxu0 0.0
        %1309 = vmatpush1.msra.mxu0 0.0
        %1310 = vmatprep.subr.mxu0 0.0
        %1311 = vmatpush1.msra.mxu0 0.0
        %1312 = vmatprep.subr.mxu0 0.0
        %1313 = vmatpush1.msra.mxu0 0.0
        %1314 = vmatprep.subr.mxu0 0.0
        %1315 = vmatpush1.msra.mxu0 0.0
        %1316 = vmatprep.subr.mxu0 0.0
        %1317 = vmatpush1.msra.mxu0 0.0
        %1318 = vmatprep.subr.mxu0 0.0
        %1319 = vmatpush1.msra.mxu0 0.0
        %1320 = vmatprep.subr.mxu0 0.0
        %1321 = vmatpush1.msra.mxu0 0.0
        %1322 = vmatprep.subr.mxu0 0.0
        %1323 = vmatpush1.msra.mxu0 0.0
        %1324 = vmatprep.subr.mxu0 0.0
        %1325 = vmatpush1.msra.mxu0 0.0
        %1326 = vmatprep.subr.mxu0 0.0
        %1327 = vmatpush1.msra.mxu0 0.0
        %1328 = vmatprep.subr.mxu0 0.0
        %1329 = vmatpush1.msra.mxu0 0.0
        %1330 = vmatprep.subr.mxu0 0.0
        %1331 = vmatpush1.msra.mxu0 0.0
        %1332 = vmatprep.subr.mxu0 0.0
        %1333 = vmatpush1.msra.mxu0 0.0
        %1334 = vmatprep.subr.mxu0 0.0
        %1335 = vmatpush1.msra.mxu0 0.0
        %1336 = vmatprep.subr.mxu0 0.0
        %1337 = vmatpush1.msra.mxu0 0.0
        %1338 = vmatprep.subr.mxu0 0.0
        %1339 = vmatpush1.msra.mxu0 0.0
        %1340 = vmatprep.subr.mxu0 0.0
        %1341 = vmatpush1.msra.mxu0 0.0
        %1342 = vmatprep.subr.mxu0 0.0
        %1343 = vmatpush1.msra.mxu0 0.0
        %1344 = vmatprep.subr.mxu0 0.0
        %1345 = vmatpush1.msra.mxu0 0.0
        %1346 = vmatprep.subr.mxu0 0.0
        %1347 = vmatpush1.msra.mxu0 0.0
        %1348 = vmatprep.mubr.f32.mxu0 0.0
        %1349 = vmatmul.mubr.f32.gmra.mrb[0].mxu0 %v1279
        %v1350 = vpop.f32.mrb[0].mxu0
        %v1351 = vadd.f32 0.0, %v1350
        %v1352 = vpop.f32.mrb[0].mxu0
        %1353 = vmatprep.mubr.f32.mxu0 0.0
        %1354 = vmatmul.mubr.f32.gmra.mrb[0].mxu0 %v1282
        %v1355 = vpop.f32.mrb[0].mxu0
        %v1356 = vadd.f32 0.0, %v1355
        %v1357 = vpop.f32.mrb[0].mxu0
        %1358 = vdwg.mxu0
        %v1359 = vld [vmem:[%s5] sm:$0xff]
        %v1360 = vld [vmem:[%s5 + $0x8] sm:$0xff]
        %v1361 = vld [vmem:[%s5 + $0x10] sm:$0xff]
        %v1362 = vld [vmem:[%s5 + $0x18] sm:$0xff]
        %v1364 = vsel %vm622, %v1108, 0
        %v1367 = vsel %vm622, %v1113, 0
        %1369 = vmatprep.subr.mxu0 0.0
        %1370 = vmatpush1.msra.mxu0 %v1359
        %1371 = vmatprep.subr.mxu0 0.0
        %1372 = vmatpush1.msra.mxu0 0.0
        %1373 = vmatprep.subr.mxu0 0.0
        %1374 = vmatpush1.msra.mxu0 0.0
        %1375 = vmatprep.subr.mxu0 0.0
        %1376 = vmatpush1.msra.mxu0 0.0
        %1377 = vmatprep.subr.mxu0 0.0
        %1378 = vmatpush1.msra.mxu0 0.0
        %1379 = vmatprep.subr.mxu0 0.0
        %1380 = vmatpush1.msra.mxu0 0.0
        %1381 = vmatprep.subr.mxu0 0.0
        %1382 = vmatpush1.msra.mxu0 0.0
        %1383 = vmatprep.subr.mxu0 0.0
        %1384 = vmatpush1.msra.mxu0 0.0
        %1385 = vmatprep.subr.mxu0 0.0
        %1386 = vmatpush1.msra.mxu0 0.0
        %1387 = vmatprep.subr.mxu0 0.0
        %1388 = vmatpush1.msra.mxu0 0.0
        %1389 = vmatprep.subr.mxu0 0.0
        %1390 = vmatpush1.msra.mxu0 0.0
        %1391 = vmatprep.subr.mxu0 0.0
        %1392 = vmatpush1.msra.mxu0 0.0
        %1393 = vmatprep.subr.mxu0 0.0
        %1394 = vmatpush1.msra.mxu0 0.0
        %1395 = vmatprep.subr.mxu0 0.0
        %1396 = vmatpush1.msra.mxu0 0.0
        %1397 = vmatprep.subr.mxu0 0.0
        %1398 = vmatpush1.msra.mxu0 0.0
        %1399 = vmatprep.subr.mxu0 0.0
        %1400 = vmatpush1.msra.mxu0 0.0
        %1401 = vmatprep.subr.mxu0 0.0
        %1402 = vmatpush1.msra.mxu0 0.0
        %1403 = vmatprep.subr.mxu0 0.0
        %1404 = vmatpush1.msra.mxu0 0.0
        %1405 = vmatprep.subr.mxu0 0.0
        %1406 = vmatpush1.msra.mxu0 0.0
        %1407 = vmatprep.subr.mxu0 0.0
        %1408 = vmatpush1.msra.mxu0 0.0
        %1409 = vmatprep.subr.mxu0 0.0
        %1410 = vmatpush1.msra.mxu0 0.0
        %1411 = vmatprep.subr.mxu0 0.0
        %1412 = vmatpush1.msra.mxu0 0.0
        %1413 = vmatprep.subr.mxu0 0.0
        %1414 = vmatpush1.msra.mxu0 0.0
        %1415 = vmatprep.subr.mxu0 0.0
        %1416 = vmatpush1.msra.mxu0 0.0
        %1417 = vmatprep.subr.mxu0 0.0
        %1418 = vmatpush1.msra.mxu0 0.0
        %1419 = vmatprep.subr.mxu0 0.0
        %1420 = vmatpush1.msra.mxu0 0.0
        %1421 = vmatprep.subr.mxu0 0.0
        %1422 = vmatpush1.msra.mxu0 0.0
        %1423 = vmatprep.subr.mxu0 0.0
        %1424 = vmatpush1.msra.mxu0 0.0
        %1425 = vmatprep.subr.mxu0 0.0
        %1426 = vmatpush1.msra.mxu0 0.0
        %1427 = vmatprep.subr.mxu0 0.0
        %1428 = vmatpush1.msra.mxu0 0.0
        %1429 = vmatprep.subr.mxu0 0.0
        %1430 = vmatpush1.msra.mxu0 0.0
        %1431 = vmatprep.subr.mxu0 0.0
        %1432 = vmatpush1.msra.mxu0 0.0
        %1433 = vmatprep.mubr.f32.mxu0 0.0
        %1434 = vmatmul.mubr.f32.gmra.mrb[0].mxu0 %v1364
        %v1435 = vpop.f32.mrb[0].mxu0
        %v1436 = vadd.f32 0.0, %v1435
        %v1437 = vpop.f32.mrb[0].mxu0
        %1438 = vmatprep.mubr.f32.mxu0 0.0
        %1439 = vmatmul.mubr.f32.gmra.mrb[0].mxu0 %v1367
        %v1440 = vpop.f32.mrb[0].mxu0
        %v1441 = vadd.f32 0.0, %v1440
        %v1442 = vpop.f32.mrb[0].mxu0
        %1443 = vdwg.mxu0
        %v1445 = vsel %vm622, %v1189, 0
        %v1448 = vsel %vm622, %v1194, 0
        %1450 = vmatprep.subr.mxu0 0.0
        %1451 = vmatpush1.msra.mxu0 %v1360
        %1452 = vmatprep.subr.mxu0 0.0
        %1453 = vmatpush1.msra.mxu0 0.0
        %1454 = vmatprep.subr.mxu0 0.0
        %1455 = vmatpush1.msra.mxu0 0.0
        %1456 = vmatprep.subr.mxu0 0.0
        %1457 = vmatpush1.msra.mxu0 0.0
        %1458 = vmatprep.subr.mxu0 0.0
        %1459 = vmatpush1.msra.mxu0 0.0
        %1460 = vmatprep.subr.mxu0 0.0
        %1461 = vmatpush1.msra.mxu0 0.0
        %1462 = vmatprep.subr.mxu0 0.0
        %1463 = vmatpush1.msra.mxu0 0.0
        %1464 = vmatprep.subr.mxu0 0.0
        %1465 = vmatpush1.msra.mxu0 0.0
        %1466 = vmatprep.subr.mxu0 0.0
        %1467 = vmatpush1.msra.mxu0 0.0
        %1468 = vmatprep.subr.mxu0 0.0
        %1469 = vmatpush1.msra.mxu0 0.0
        %1470 = vmatprep.subr.mxu0 0.0
        %1471 = vmatpush1.msra.mxu0 0.0
        %1472 = vmatprep.subr.mxu0 0.0
        %1473 = vmatpush1.msra.mxu0 0.0
        %1474 = vmatprep.subr.mxu0 0.0
        %1475 = vmatpush1.msra.mxu0 0.0
        %1476 = vmatprep.subr.mxu0 0.0
        %1477 = vmatpush1.msra.mxu0 0.0
        %1478 = vmatprep.subr.mxu0 0.0
        %1479 = vmatpush1.msra.mxu0 0.0
        %1480 = vmatprep.subr.mxu0 0.0
        %1481 = vmatpush1.msra.mxu0 0.0
        %1482 = vmatprep.subr.mxu0 0.0
        %1483 = vmatpush1.msra.mxu0 0.0
        %1484 = vmatprep.subr.mxu0 0.0
        %1485 = vmatpush1.msra.mxu0 0.0
        %1486 = vmatprep.subr.mxu0 0.0
        %1487 = vmatpush1.msra.mxu0 0.0
        %1488 = vmatprep.subr.mxu0 0.0
        %1489 = vmatpush1.msra.mxu0 0.0
        %1490 = vmatprep.subr.mxu0 0.0
        %1491 = vmatpush1.msra.mxu0 0.0
        %1492 = vmatprep.subr.mxu0 0.0
        %1493 = vmatpush1.msra.mxu0 0.0
        %1494 = vmatprep.subr.mxu0 0.0
        %1495 = vmatpush1.msra.mxu0 0.0
        %1496 = vmatprep.subr.mxu0 0.0
        %1497 = vmatpush1.msra.mxu0 0.0
        %1498 = vmatprep.subr.mxu0 0.0
        %1499 = vmatpush1.msra.mxu0 0.0
        %1500 = vmatprep.subr.mxu0 0.0
        %1501 = vmatpush1.msra.mxu0 0.0
        %1502 = vmatprep.subr.mxu0 0.0
        %1503 = vmatpush1.msra.mxu0 0.0
        %1504 = vmatprep.subr.mxu0 0.0
        %1505 = vmatpush1.msra.mxu0 0.0
        %1506 = vmatprep.subr.mxu0 0.0
        %1507 = vmatpush1.msra.mxu0 0.0
        %1508 = vmatprep.subr.mxu0 0.0
        %1509 = vmatpush1.msra.mxu0 0.0
        %1510 = vmatprep.subr.mxu0 0.0
        %1511 = vmatpush1.msra.mxu0 0.0
        %1512 = vmatprep.subr.mxu0 0.0
        %1513 = vmatpush1.msra.mxu0 0.0
        %1514 = vmatprep.mubr.f32.mxu0 0.0
        %1515 = vmatmul.mubr.f32.gmra.mrb[0].mxu0 %v1445
        %v1516 = vpop.f32.mrb[0].mxu0
        %v1517 = vadd.f32 0.0, %v1516
        %v1518 = vpop.f32.mrb[0].mxu0
        %1519 = vmatprep.mubr.f32.mxu0 0.0
        %1520 = vmatmul.mubr.f32.gmra.mrb[0].mxu0 %v1448
        %v1521 = vpop.f32.mrb[0].mxu0
        %v1522 = vadd.f32 0.0, %v1521
        %v1523 = vpop.f32.mrb[0].mxu0
        %1524 = vdwg.mxu0
        %v1526 = vsel %vm622, %v1270, 0
        %v1529 = vsel %vm622, %v1275, 0
        %1531 = vmatprep.subr.mxu0 0.0
        %1532 = vmatpush1.msra.mxu0 %v1361
        %1533 = vmatprep.subr.mxu0 0.0
        %1534 = vmatpush1.msra.mxu0 0.0
        %1535 = vmatprep.subr.mxu0 0.0
        %1536 = vmatpush1.msra.mxu0 0.0
        %1537 = vmatprep.subr.mxu0 0.0
        %1538 = vmatpush1.msra.mxu0 0.0
        %1539 = vmatprep.subr.mxu0 0.0
        %1540 = vmatpush1.msra.mxu0 0.0
        %1541 = vmatprep.subr.mxu0 0.0
        %1542 = vmatpush1.msra.mxu0 0.0
        %1543 = vmatprep.subr.mxu0 0.0
        %1544 = vmatpush1.msra.mxu0 0.0
        %1545 = vmatprep.subr.mxu0 0.0
        %1546 = vmatpush1.msra.mxu0 0.0
        %1547 = vmatprep.subr.mxu0 0.0
        %1548 = vmatpush1.msra.mxu0 0.0
        %1549 = vmatprep.subr.mxu0 0.0
        %1550 = vmatpush1.msra.mxu0 0.0
        %1551 = vmatprep.subr.mxu0 0.0
        %1552 = vmatpush1.msra.mxu0 0.0
        %1553 = vmatprep.subr.mxu0 0.0
        %1554 = vmatpush1.msra.mxu0 0.0
        %1555 = vmatprep.subr.mxu0 0.0
        %1556 = vmatpush1.msra.mxu0 0.0
        %1557 = vmatprep.subr.mxu0 0.0
        %1558 = vmatpush1.msra.mxu0 0.0
        %1559 = vmatprep.subr.mxu0 0.0
        %1560 = vmatpush1.msra.mxu0 0.0
        %1561 = vmatprep.subr.mxu0 0.0
        %1562 = vmatpush1.msra.mxu0 0.0
        %1563 = vmatprep.subr.mxu0 0.0
        %1564 = vmatpush1.msra.mxu0 0.0
        %1565 = vmatprep.subr.mxu0 0.0
        %1566 = vmatpush1.msra.mxu0 0.0
        %1567 = vmatprep.subr.mxu0 0.0
        %1568 = vmatpush1.msra.mxu0 0.0
        %1569 = vmatprep.subr.mxu0 0.0
        %1570 = vmatpush1.msra.mxu0 0.0
        %1571 = vmatprep.subr.mxu0 0.0
        %1572 = vmatpush1.msra.mxu0 0.0
        %1573 = vmatprep.subr.mxu0 0.0
        %1574 = vmatpush1.msra.mxu0 0.0
        %1575 = vmatprep.subr.mxu0 0.0
        %1576 = vmatpush1.msra.mxu0 0.0
        %1577 = vmatprep.subr.mxu0 0.0
        %1578 = vmatpush1.msra.mxu0 0.0
        %1579 = vmatprep.subr.mxu0 0.0
        %1580 = vmatpush1.msra.mxu0 0.0
        %1581 = vmatprep.subr.mxu0 0.0
        %1582 = vmatpush1.msra.mxu0 0.0
        %1583 = vmatprep.subr.mxu0 0.0
        %1584 = vmatpush1.msra.mxu0 0.0
        %1585 = vmatprep.subr.mxu0 0.0
        %1586 = vmatpush1.msra.mxu0 0.0
        %1587 = vmatprep.subr.mxu0 0.0
        %1588 = vmatpush1.msra.mxu0 0.0
        %1589 = vmatprep.subr.mxu0 0.0
        %1590 = vmatpush1.msra.mxu0 0.0
        %1591 = vmatprep.subr.mxu0 0.0
        %1592 = vmatpush1.msra.mxu0 0.0
        %1593 = vmatprep.subr.mxu0 0.0
        %1594 = vmatpush1.msra.mxu0 0.0
        %1595 = vmatprep.mubr.f32.mxu0 0.0
        %1596 = vmatmul.mubr.f32.gmra.mrb[0].mxu0 %v1526
        %v1597 = vpop.f32.mrb[0].mxu0
        %v1598 = vadd.f32 0.0, %v1597
        %v1599 = vpop.f32.mrb[0].mxu0
        %1600 = vmatprep.mubr.f32.mxu0 0.0
        %1601 = vmatmul.mubr.f32.gmra.mrb[0].mxu0 %v1529
        %v1602 = vpop.f32.mrb[0].mxu0
        %v1603 = vadd.f32 0.0, %v1602
        %v1604 = vpop.f32.mrb[0].mxu0
        %1605 = vdwg.mxu0
        %v1607 = vsel %vm622, %v1351, 0
        %v1610 = vsel %vm622, %v1356, 0
        %1612 = vmatprep.subr.mxu0 0.0
        %1613 = vmatpush1.msra.mxu0 %v1362
        %1614 = vmatprep.subr.mxu0 0.0
        %1615 = vmatpush1.msra.mxu0 0.0
        %1616 = vmatprep.subr.mxu0 0.0
        %1617 = vmatpush1.msra.mxu0 0.0
        %1618 = vmatprep.subr.mxu0 0.0
        %1619 = vmatpush1.msra.mxu0 0.0
        %1620 = vmatprep.subr.mxu0 0.0
        %1621 = vmatpush1.msra.mxu0 0.0
        %1622 = vmatprep.subr.mxu0 0.0
        %1623 = vmatpush1.msra.mxu0 0.0
        %1624 = vmatprep.subr.mxu0 0.0
        %1625 = vmatpush1.msra.mxu0 0.0
        %1626 = vmatprep.subr.mxu0 0.0
        %1627 = vmatpush1.msra.mxu0 0.0
        %1628 = vmatprep.subr.mxu0 0.0
        %1629 = vmatpush1.msra.mxu0 0.0
        %1630 = vmatprep.subr.mxu0 0.0
        %1631 = vmatpush1.msra.mxu0 0.0
        %1632 = vmatprep.subr.mxu0 0.0
        %1633 = vmatpush1.msra.mxu0 0.0
        %1634 = vmatprep.subr.mxu0 0.0
        %1635 = vmatpush1.msra.mxu0 0.0
        %1636 = vmatprep.subr.mxu0 0.0
        %1637 = vmatpush1.msra.mxu0 0.0
        %1638 = vmatprep.subr.mxu0 0.0
        %1639 = vmatpush1.msra.mxu0 0.0
        %1640 = vmatprep.subr.mxu0 0.0
        %1641 = vmatpush1.msra.mxu0 0.0
        %1642 = vmatprep.subr.mxu0 0.0
        %1643 = vmatpush1.msra.mxu0 0.0
        %1644 = vmatprep.subr.mxu0 0.0
        %1645 = vmatpush1.msra.mxu0 0.0
        %1646 = vmatprep.subr.mxu0 0.0
        %1647 = vmatpush1.msra.mxu0 0.0
        %1648 = vmatprep.subr.mxu0 0.0
        %1649 = vmatpush1.msra.mxu0 0.0
        %1650 = vmatprep.subr.mxu0 0.0
        %1651 = vmatpush1.msra.mxu0 0.0
        %1652 = vmatprep.subr.mxu0 0.0
        %1653 = vmatpush1.msra.mxu0 0.0
        %1654 = vmatprep.subr.mxu0 0.0
        %1655 = vmatpush1.msra.mxu0 0.0
        %1656 = vmatprep.subr.mxu0 0.0
        %1657 = vmatpush1.msra.mxu0 0.0
        %1658 = vmatprep.subr.mxu0 0.0
        %1659 = vmatpush1.msra.mxu0 0.0
        %1660 = vmatprep.subr.mxu0 0.0
        %1661 = vmatpush1.msra.mxu0 0.0
        %1662 = vmatprep.subr.mxu0 0.0
        %1663 = vmatpush1.msra.mxu0 0.0
        %1664 = vmatprep.subr.mxu0 0.0
        %1665 = vmatpush1.msra.mxu0 0.0
        %1666 = vmatprep.subr.mxu0 0.0
        %1667 = vmatpush1.msra.mxu0 0.0
        %1668 = vmatprep.subr.mxu0 0.0
        %1669 = vmatpush1.msra.mxu0 0.0
        %1670 = vmatprep.subr.mxu0 0.0
        %1671 = vmatpush1.msra.mxu0 0.0
        %1672 = vmatprep.subr.mxu0 0.0
        %1673 = vmatpush1.msra.mxu0 0.0
        %1674 = vmatprep.subr.mxu0 0.0
        %1675 = vmatpush1.msra.mxu0 0.0
        %1676 = vmatprep.mubr.f32.mxu0 0.0
        %1677 = vmatmul.mubr.f32.gmra.mrb[0].mxu0 %v1607
        %v1678 = vpop.f32.mrb[0].mxu0
        %v1679 = vadd.f32 0.0, %v1678
        %v1680 = vpop.f32.mrb[0].mxu0
        %1681 = vmatprep.mubr.f32.mxu0 0.0
        %1682 = vmatmul.mubr.f32.gmra.mrb[0].mxu0 %v1610
        %v1683 = vpop.f32.mrb[0].mxu0
        %v1684 = vadd.f32 0.0, %v1683
        %v1685 = vpop.f32.mrb[0].mxu0
        %1686 = vdwg.mxu0
        %v1687 = vadd.f32 %v1436, %v1517
        %v1688 = vadd.f32 %v1687, %v1598
        %v1689 = vadd.f32 %v1688, %v1679
        %v1690 = vadd.f32 %v1441, %v1522
        %v1691 = vadd.f32 %v1690, %v1603
        %v1692 = vadd.f32 %v1691, %v1684
        %v1693 = vld [vmem:[%s6] sm:$0x1]
        %v1695 = vlaneseq
        %v1696 = vshrl.u32 %v1695, 7
        %v1697 = vsub.s32 0, %v1696
        %v1698 = vrot.slane %v1693, %v1697
        %v1700 = vadd.f32 %v1689, %v1698
        %v1701 = vadd.f32 %v1692, %v1698
        %1702 = vst [vmem:[%s309] sm:$0xff] %v1700
        %1703 = vst [vmem:[%s309 + $0x8] sm:$0xff] %v1701
        %s1704 = sand.u32 %s202, 1
        %s1705 = scalar_lea.sflag [#allocation3], %s1704
        %s1706 = sand.u32 %s202, 1
        %s1707 = smul.addr %s1706, 16
        %s1708 = scalar_lea.vmem [#allocation2], %s1707
        // Predicated region
        $region49: #{tpu_custom_call.1} parent=47 // pred_check
          %p1709 = pneg %p212
        $region50: #{tpu_custom_call.1} parent=47 // pred_check_branch
          %1711 = sbr.rel (%p1709) target = $region52
        $region51: #{tpu_custom_call.1} parent=47 // pred_region
          %s1712 = smul.u32 2, %s26
          %s1714 = ssub.s32 256, 256
          %1715 = vsyncadd %s1705, %s1714
          %s1716 = smul.addr %s25, 2
          %s1717 = sadd.s32 %s1712, %s1716
          %s1718 = smul.addr %s1717, 128
          %s1719 = scalar_lea.hbm %s7, %s1718
          %s1720 = sshll.u32 %s1708, 4
          %s1721 = int_to_ptr.vmem [resolvable:$true] %s1720
          %1726 = dma.vmem_to_hbm [thread:$0]  %s1721, 256, %s1719, %s1705, 128, 128, 8
        $region52: #{tpu_custom_call.1} parent=47 // pred_fallthru
          _
      $region48: #{tpu_custom_call.1} parent=5 // pred_fallthru
        _
      %p1727 = scmp.le.s32.totalorder 2, %s16
      // Predicated region
      $region53: #{tpu_custom_call.1} parent=5 // pred_check
        %p1728 = pneg %p1727
      $region54: #{tpu_custom_call.1} parent=5 // pred_check_branch
        %1730 = sbr.rel (%p1728) target = $region56
      $region55: #{tpu_custom_call.1} parent=5 // pred_region
        %s1731 = ssub.s32 %s16, 2
        // Predicated region
        $region57: #{tpu_custom_call.1} parent=55 // pred_check
          %p1732 = pneg %p218
        $region58: #{tpu_custom_call.1} parent=55 // pred_check_branch
          %1734 = sbr.rel (%p1732) target = $region60
        $region59: #{tpu_custom_call.1} parent=55 // pred_region
          %s1735 = sand.u32 %s203, 1
          %s1736 = scalar_lea.sflag [#allocation3], %s1735
          %s1737 = sand.u32 %s203, 1
          %s1738 = smul.addr %s1737, 16
          %s1739 = scalar_lea.vmem [#allocation2], %s1738
          %1740 = dma.done %s1736, 256
        $region60: #{tpu_custom_call.1} parent=55 // pred_fallthru
          _
      $region56: #{tpu_custom_call.1} parent=5 // pred_fallthru
        _
    $region6: #{tpu_custom_call.1} parent=1 // loop_footer
      %s20 = sadd.s32 1, %s16
    $region7: #{tpu_custom_call.1} parent=1 // loop_footer_branch
      %15 = sbr.rel target = $region3
    $region8: #{tpu_custom_call.1} parent=1 // loop_exit
      _
    %1741 = vsyncpa [#allocation3], 1
    %s1742 = scalar_lea.sflag [#allocation3], 1
    %1743 = vsyncpa %s1742, 1

</llo_original>
